<compile_context>
chip_gen: v7x
topology: tpu7x:2x2x1
jax: 0.10.0
libtpu: 0.0.40
codegen_flags: <defaults>
</compile_context>

<pallas_src>
import math
import jax
import jax.numpy as jnp
from jax import lax
from jax.experimental import pallas as pl
from jax.experimental.pallas import tpu as pltpu

LEAKY_SLOPE = 0.1
BN_EPS = 1e-5


def _round_up(x, m):
    return ((x + m - 1) // m) * m


# ----------------------------------------------------------------------------
# Pallas kernels: fused (patches @ weight) * scale + bias -> leaky_relu [+ res]
# grid = (M_tiles, Cout_tiles, K_tiles); K (reduction) is the last axis.
# ----------------------------------------------------------------------------
def _conv_kernel(p_ref, w_ref, scale_ref, bias_ref, o_ref, acc_ref):
    k = pl.program_id(2)

    @pl.when(k == 0)
    def _():
        acc_ref[...] = jnp.zeros_like(acc_ref)

    acc_ref[...] += jnp.dot(p_ref[...], w_ref[...],
                            preferred_element_type=jnp.float32)

    @pl.when(k == pl.num_programs(2) - 1)
    def _():
        y = acc_ref[...] * scale_ref[...] + bias_ref[...]      # folded BatchNorm
        y = jnp.where(y >= 0, y, LEAKY_SLOPE * y)              # LeakyReLU(0.1)
        o_ref[...] = y.astype(o_ref.dtype)


def _conv_res_kernel(p_ref, w_ref, scale_ref, bias_ref, res_ref, o_ref, acc_ref):
    k = pl.program_id(2)

    @pl.when(k == 0)
    def _():
        acc_ref[...] = jnp.zeros_like(acc_ref)

    acc_ref[...] += jnp.dot(p_ref[...], w_ref[...],
                            preferred_element_type=jnp.float32)

    @pl.when(k == pl.num_programs(2) - 1)
    def _():
        y = acc_ref[...] * scale_ref[...] + bias_ref[...]      # folded BatchNorm
        y = jnp.where(y >= 0, y, LEAKY_SLOPE * y)              # LeakyReLU(0.1)
        y = y + res_ref[...].astype(jnp.float32)               # fused residual add
        o_ref[...] = y.astype(o_ref.dtype)


def fused_conv_bn_leaky(patches, w_pad, scale_pad, bias_pad, cout, residual=None):
    """patches: [M, K] bf16; w_pad: [Kp, Cp] bf16 (pre-padded at init);
    scale_pad/bias_pad: [1, Cp] f32; residual: [M, cout] bf16 or None."""
    M, K = patches.shape
    Kp, Cp = w_pad.shape

    # Tile sizes: feed the 256x256 MXU (v6e/v7x) when padded dims allow,
    # otherwise 128 (also matches v5e's 128-wide MXU).
    tk = 256 if Kp % 256 == 0 else 128
    tn = 256 if Cp % 256 == 0 else 128
    Mp8 = _round_up(M, 8)
    tm = min(512, Mp8)
    Mp = _round_up(M, tm)

    p = patches
    if (Mp, Kp) != (M, K):
        p = jnp.pad(patches, ((0, Mp - M), (0, Kp - K)))
    p = p.astype(jnp.bfloat16)

    grid = (Mp // tm, Cp // tn, Kp // tk)
    in_specs = [
        pl.BlockSpec((tm, tk), lambda i, j, k: (i, k)),   # patches
        pl.BlockSpec((tk, tn), lambda i, j, k: (k, j)),   # weight
        pl.BlockSpec((1, tn), lambda i, j, k: (0, j)),    # BN scale (k-invariant)
        pl.BlockSpec((1, tn), lambda i, j, k: (0, j)),    # BN bias  (k-invariant)
    ]
    out_spec = pl.BlockSpec((tm, tn), lambda i, j, k: (i, j))
    scratch = [pltpu.VMEM((tm, tn), jnp.float32)]
    cparams = pltpu.CompilerParams(
        dimension_semantics=("parallel", "parallel", "arbitrary"))
    out_shape = jax.ShapeDtypeStruct((Mp, Cp), jnp.bfloat16)

    if residual is None:
        out = pl.pallas_call(
            _conv_kernel,
            out_shape=out_shape,
            grid_spec=pltpu.PrefetchScalarGridSpec(
                num_scalar_prefetch=0,
                grid=grid,
                in_specs=in_specs,
                out_specs=out_spec,
                scratch_shapes=scratch),
            compiler_params=cparams,
        )(p, w_pad, scale_pad, bias_pad)
    else:
        r = residual
        rM, rC = r.shape
        if (Mp, Cp) != (rM, rC):
            r = jnp.pad(r, ((0, Mp - rM), (0, Cp - rC)))
        r = r.astype(jnp.bfloat16)
        out = pl.pallas_call(
            _conv_res_kernel,
            out_shape=out_shape,
            grid_spec=pltpu.PrefetchScalarGridSpec(
                num_scalar_prefetch=0,
                grid=grid,
                in_specs=in_specs + [
                    pl.BlockSpec((tm, tn), lambda i, j, k: (i, j))],  # residual
                out_specs=out_spec,
                scratch_shapes=scratch),
            compiler_params=cparams,
        )(p, w_pad, scale_pad, bias_pad, r)

    return out[:M, :cout]


# ----------------------------------------------------------------------------
# Glue: im2col patch extraction (layout plumbing only; skipped for 1x1 convs)
# ----------------------------------------------------------------------------
def im2col(x_nhwc, kh, kw, stride, pad):
    N, H, W, C = x_nhwc.shape
    OH = (H + 2 * pad - kh) // stride + 1
    OW = (W + 2 * pad - kw) // stride + 1
    xp = jnp.pad(x_nhwc, ((0, 0), (pad, pad), (pad, pad), (0, 0)))
    cols = []
    for i in range(kh):
        for j in range(kw):
            patch = lax.slice(
                xp,
                (0, i, j, 0),
                (N, i + (OH - 1) * stride + 1, j + (OW - 1) * stride + 1, C),
                (1, stride, stride, 1))
            cols.append(patch)                       # [N, OH, OW, C]
    patches = jnp.concatenate(cols, axis=-1)         # [N, OH, OW, kh*kw*C]
    return patches.reshape(N * OH * OW, kh * kw * C), OH, OW


def conv_block(x_nhwc, params, residual=None):
    """Conv2d(no bias) + BatchNorm2d(eval) + LeakyReLU(0.1) [+ residual add]."""
    kh, kw, cin, cout = params["wshape"]
    N = x_nhwc.shape[0]
    if kh == 1 and kw == 1 and params["stride"] == 1 and params["pad"] == 0:
        _, H, W, C = x_nhwc.shape
        patches = x_nhwc.reshape(N * H * W, C)       # 1x1 conv: no im2col needed
        OH, OW = H, W
    else:
        patches, OH, OW = im2col(x_nhwc, kh, kw, params["stride"], params["pad"])
    res = (residual.reshape(N * OH * OW, residual.shape[-1])
           if residual is not None else None)
    out = fused_conv_bn_leaky(patches, params["w_pad"], params["scale_pad"],
                              params["bias_pad"], cout, res)
    return out.reshape(N, OH, OW, cout)


# ----------------------------------------------------------------------------
# Deterministic parameter construction (synthetic weights, no checkpoint).
# Weights / BN params are padded to (Kp, Cp) / (1, Cp) ONCE here, in bf16/f32.
# ----------------------------------------------------------------------------
def make_conv_params(key, cin, cout, ksize, stride, pad):
    fan_in = ksize * ksize * cin
    std = math.sqrt(2.0 / fan_in)
    w = std * jax.random.normal(key, (ksize, ksize, cin, cout), jnp.float32)
    gamma = jnp.ones((cout,), jnp.float32)
    beta = jnp.zeros((cout,), jnp.float32)
    run_mean = jnp.zeros((cout,), jnp.float32)
    run_var = jnp.ones((cout,), jnp.float32)
    scale = gamma / jnp.sqrt(run_var + BN_EPS)       # eval-mode BN folded
    bias = beta - run_mean * scale

    K = ksize * ksize * cin
    Kp = _round_up(K, 128)
    Cp = _round_up(cout, 128)
    w_mat = w.reshape(K, cout).astype(jnp.bfloat16)
    w_pad = jnp.zeros((Kp, Cp), jnp.bfloat16).at[:K, :cout].set(w_mat)
    scale_pad = jnp.zeros((1, Cp), jnp.float32).at[0, :cout].set(scale)
    bias_pad = jnp.zeros((1, Cp), jnp.float32).at[0, :cout].set(bias)
    return {"w_pad": w_pad, "scale_pad": scale_pad, "bias_pad": bias_pad,
            "wshape": (ksize, ksize, cin, cout), "stride": stride, "pad": pad}


STAGES = [(32, 64, 1), (64, 128, 2), (128, 256, 8), (256, 512, 8), (512, 1024, 4)]


def init_darknet53(key):
    keys = iter(jax.random.split(key, 256))
    params = {"conv1": make_conv_params(next(keys), 3, 32, 3, 1, 1), "stages": []}
    for cin, cout, nblocks in STAGES:
        stage = {"down": make_conv_params(next(keys), cin, cout, 3, 2, 1), "blocks": []}
        for _ in range(nblocks):
            stage["blocks"].append({
                "c1": make_conv_params(next(keys), cout, cout // 2, 1, 1, 0),
                "c2": make_conv_params(next(keys), cout // 2, cout, 3, 1, 1),
            })
        params["stages"].append(stage)
    return params


# ----------------------------------------------------------------------------
# Forward (input NCHW, outputs NCHW f32, matching the PyTorch module)
# ----------------------------------------------------------------------------
def darknet53_forward(params, x_nchw):
    x = jnp.transpose(x_nchw, (0, 2, 3, 1)).astype(jnp.bfloat16)   # NCHW -> NHWC bf16
    out = conv_block(x, params["conv1"])
    feats = []
    for stage in params["stages"]:
        out = conv_block(out, stage["down"])
        for blk in stage["blocks"]:
            h = conv_block(out, blk["c1"])
            out = conv_block(h, blk["c2"], residual=out)   # ResBlock: conv2(conv1(x)) + x
        feats.append(out)
    to_nchw = lambda t: jnp.transpose(t, (0, 3, 1, 2)).astype(jnp.float32)
    return to_nchw(feats[2]), to_nchw(feats[3]), to_nchw(feats[4])   # (C3, C4, C5)


if __name__ == "__main__":
    key = jax.random.PRNGKey(0)
    pkey, xkey = jax.random.split(key)
    params = init_darknet53(pkey)
    # Small input consistent with the module: 3 input channels (fixed by conv1),
    # 32x32 spatial so that 5 stride-2 stages give C3=4x4, C4=2x2, C5=1x1.
    x = jax.random.normal(xkey, (2, 3, 32, 32), jnp.float32)   # NCHW like PyTorch
    C3, C4, C5 = darknet53_forward(params, x)
    jax.block_until_ready((C3, C4, C5))
    assert C3.shape == (2, 256, 4, 4), C3.shape
    assert C4.shape == (2, 512, 2, 2), C4.shape
    assert C5.shape == (2, 1024, 1, 1), C5.shape
    assert bool(jnp.all(jnp.isfinite(C3))) and bool(jnp.all(jnp.isfinite(C5)))
    print("KERNEL_OK")
</pallas_src>

<mosaic_0001>
module attributes {stable_mosaic.version = 11 : i64} {
  func.func @_conv_kernel(%arg0: i32, %arg1: i32, %arg2: i32, %arg3: memref<512x128xbf16, #tpu.memory_space<vmem>>, %arg4: memref<128x128xbf16, #tpu.memory_space<vmem>>, %arg5: memref<1x128xf32, #tpu.memory_space<vmem>>, %arg6: memref<1x128xf32, #tpu.memory_space<vmem>>, %arg7: memref<512x128xbf16, #tpu.memory_space<vmem>>, %arg8: memref<512x128xf32, #tpu.memory_space<vmem>>) attributes {dimension_semantics = [#tpu.dimension_semantics<parallel>, #tpu.dimension_semantics<parallel>, #tpu.dimension_semantics<arbitrary>], iteration_bounds = array<i64: 4, 1, 1>, scalar_prefetch = 0 : i64, scratch_operands = 1 : i64, tpu.core_type = #tpu.core_type<tc>, window_params = [{transform_indices = @transform_0, window_bounds = array<i64: 512, 128>}, {transform_indices = @transform_1, window_bounds = array<i64: 128, 128>}, {transform_indices = @transform_2, window_bounds = array<i64: 1, 128>}, {transform_indices = @transform_3, window_bounds = array<i64: 1, 128>}, {transform_indices = @transform_4, window_bounds = array<i64: 512, 128>}]} {
    %c0_i32 = arith.constant 0 : i32
    %0 = arith.cmpi eq, %arg2, %c0_i32 : i32
    %1 = arith.extui %0 : i1 to i32
    %c0_i32_0 = arith.constant 0 : i32
    %2 = arith.cmpi ne, %1, %c0_i32_0 : i32
    scf.if %2 {
      %cst_10 = arith.constant 0.000000e+00 : f32
      %12 = vector.broadcast %cst_10 : f32 to vector<512x128xf32>
      %c0_11 = arith.constant 0 : index
      %c0_12 = arith.constant 0 : index
      %13 = vector.load %arg8[%c0_11, %c0_12] : memref<512x128xf32, #tpu.memory_space<vmem>>, vector<512x128xf32>
      tpu.vector_store %arg8[%c0_11, %c0_12], %12 {strides = array<i32>} : memref<512x128xf32, #tpu.memory_space<vmem>>, vector<512x128xf32>,
    } else {
    }
    %c0 = arith.constant 0 : index
    %c0_1 = arith.constant 0 : index
    %3 = vector.load %arg8[%c0, %c0_1] : memref<512x128xf32, #tpu.memory_space<vmem>>, vector<512x128xf32>
    %c0_2 = arith.constant 0 : index
    %c0_3 = arith.constant 0 : index
    %4 = vector.load %arg3[%c0_2, %c0_3] : memref<512x128xbf16, #tpu.memory_space<vmem>>, vector<512x128xbf16>
    %c0_4 = arith.constant 0 : index
    %c0_5 = arith.constant 0 : index
    %5 = vector.load %arg4[%c0_4, %c0_5] : memref<128x128xbf16, #tpu.memory_space<vmem>>, vector<128x128xbf16>
    %cst = arith.constant dense<0.000000e+00> : vector<512x128xf32>
    %6 = tpu.matmul %4, %5, %cst {dimension_numbers = #tpu.dot_dimension_numbers<[1], [0], [0], [1], [0, 0, 1, 1], [], []>} : vector<512x128xbf16>, vector<128x128xbf16>, vector<512x128xf32> -> vector<512x128xf32>
    %7 = arith.addf %3, %6 : vector<512x128xf32>
    %c0_6 = arith.constant 0 : index
    %c0_7 = arith.constant 0 : index
    %8 = vector.load %arg8[%c0_6, %c0_7] : memref<512x128xf32, #tpu.memory_space<vmem>>, vector<512x128xf32>
    tpu.vector_store %arg8[%c0_6, %c0_7], %7 {strides = array<i32>} : memref<512x128xf32, #tpu.memory_space<vmem>>, vector<512x128xf32>,
    %c0_i32_8 = arith.constant 0 : i32
    %9 = arith.cmpi eq, %arg2, %c0_i32_8 : i32
    %10 = arith.extui %9 : i1 to i32
    %c0_i32_9 = arith.constant 0 : i32
    %11 = arith.cmpi ne, %10, %c0_i32_9 : i32
    scf.if %11 {
      %c0_10 = arith.constant 0 : index
      %c0_11 = arith.constant 0 : index
      %12 = vector.load %arg8[%c0_10, %c0_11] : memref<512x128xf32, #tpu.memory_space<vmem>>, vector<512x128xf32>
      %c0_12 = arith.constant 0 : index
      %c0_13 = arith.constant 0 : index
      %13 = vector.load %arg5[%c0_12, %c0_13] : memref<1x128xf32, #tpu.memory_space<vmem>>, vector<1x128xf32>
      %14 = vector.broadcast %13 : vector<1x128xf32> to vector<512x128xf32>
      %15 = arith.mulf %12, %14 : vector<512x128xf32>
      %c0_14 = arith.constant 0 : index
      %c0_15 = arith.constant 0 : index
      %16 = vector.load %arg6[%c0_14, %c0_15] : memref<1x128xf32, #tpu.memory_space<vmem>>, vector<1x128xf32>
      %17 = vector.broadcast %16 : vector<1x128xf32> to vector<512x128xf32>
      %18 = arith.addf %15, %17 : vector<512x128xf32>
      %cst_16 = arith.constant 0.000000e+00 : f32
      %19 = vector.broadcast %cst_16 : f32 to vector<512x128xf32>
      %20 = arith.cmpf oge, %18, %19 : vector<512x128xf32>
      %cst_17 = arith.constant 1.000000e-01 : f32
      %21 = vector.broadcast %cst_17 : f32 to vector<512x128xf32>
      %22 = arith.mulf %21, %18 : vector<512x128xf32>
      %23 = arith.select %20, %18, %22 : vector<512x128xi1>, vector<512x128xf32>
      %24 = arith.truncf %23 : vector<512x128xf32> to vector<512x128xbf16>
      %c0_18 = arith.constant 0 : index
      %c0_19 = arith.constant 0 : index
      %25 = vector.load %arg7[%c0_18, %c0_19] : memref<512x128xbf16, #tpu.memory_space<vmem>>, vector<512x128xbf16>
      tpu.vector_store %arg7[%c0_18, %c0_19], %24 {strides = array<i32>} : memref<512x128xbf16, #tpu.memory_space<vmem>>, vector<512x128xbf16>,
    } else {
    }
    return
  }
  func.func @transform_0(%arg0: i32, %arg1: i32, %arg2: i32) -> (i32, i32) {
    %c0_i32 = arith.constant 0 : i32
    return %arg0, %arg2 : i32, i32
  }
  func.func @transform_1(%arg0: i32, %arg1: i32, %arg2: i32) -> (i32, i32) {
    %c0_i32 = arith.constant 0 : i32
    return %arg2, %arg1 : i32, i32
  }
  func.func @transform_2(%arg0: i32, %arg1: i32, %arg2: i32) -> (i32, i32) {
    %c0_i32 = arith.constant 0 : i32
    %c0_i32_0 = arith.constant 0 : i32
    return %c0_i32, %arg1 : i32, i32
  }
  func.func @transform_3(%arg0: i32, %arg1: i32, %arg2: i32) -> (i32, i32) {
    %c0_i32 = arith.constant 0 : i32
    %c0_i32_0 = arith.constant 0 : i32
    return %c0_i32, %arg1 : i32, i32
  }
  func.func @transform_4(%arg0: i32, %arg1: i32, %arg2: i32) -> (i32, i32) {
    %c0_i32 = arith.constant 0 : i32
    return %arg0, %arg1 : i32, i32
  }
}

</mosaic_0001>

<llo_original>
// kernel: tpu_custom_call.1
$region0: #{tpu_custom_call.1}
  #allocation0 [shape = 'u32[]', space=smem, size = 0x4, offset = 0x4, fixed_abs, tag = 'smem constant byte address 0x4 - core index']
  #allocation1 [shape = 'u32[144,128]{1,0:T(1,128)}', space=vmem, size = 0x12000, scoped, tag = 'internal scratch']
  #allocation2 [shape = 'f32[512,128]{1,0:T(8,128)}', space=vmem, size = 0x40000, scoped, tag = 'scratch operand']
  %s0 = inlined_call_operand.hbm [shape: bf16[2048,128], index: 0, kind: input, shape index: {}]
  %s1 = inlined_call_operand.hbm [shape: bf16[128,128], index: 1, kind: input, shape index: {}]
  %s2 = inlined_call_operand.vmem [shape: f32[1,128], index: 2, kind: input, shape index: {}]
  %s3 = inlined_call_operand.vmem [shape: f32[1,128], index: 3, kind: input, shape index: {}]
  %s4 = inlined_call_operand.hbm [shape: bf16[2048,128], index: 4, kind: output, shape index: {}]
  %s5 = sld [smem:[#allocation0]]
  $region65: #{tpu_custom_call.1} parent=0
    _
  %s7 = ssub.s32 1, %s5
  %s8 = scalar_select 0, %s7, %s5
  $region1: #{tpu_custom_call.1} parent=0
    #allocation3 [shape = 'u8[262144]{0}', space=vmem, size = 0x40000, scoped, tag = 'input window, operand 0']
    #allocation4 [shape = 's32[2]{0}', space=sflag, size = 0x8, scoped, tag = 'scoped memory for tpu_custom_call.1']
    #allocation5 [shape = 's32[2]{0}', space=sflag, size = 0x8, scoped, tag = 'scoped memory for tpu_custom_call.1']
    #allocation6 [shape = 'u8[32768]{0}', space=vmem, size = 0x8000, scoped, tag = 'input window, operand 1, single buffered']
    #allocation7 [shape = 's32[1]{0}', space=sflag, size = 0x4, scoped, tag = 'scoped memory for tpu_custom_call.1']
    #allocation8 [shape = 'u8[262144]{0}', space=vmem, size = 0x40000, scoped, tag = 'output window, operand 0']
    %9 = vsyncpa [#allocation4], 0
    %s10 = scalar_lea.sflag [#allocation4], 1
    %11 = vsyncpa %s10, 0
    %12 = vsyncpa [#allocation7], 0
    %13 = vsyncpa [#allocation5], 0
    %s14 = scalar_lea.sflag [#allocation5], 1
    %15 = vsyncpa %s14, 0
    loop: start=0, step=1, limit=6
    $region2: #{tpu_custom_call.1} parent=1 // loop_pre_header
      _
    $region3: #{tpu_custom_call.1} parent=1 // loop_header
      %s17 = sphi 0, %s21
      %p18 = scmp.ge.s32.totalorder %s17, 6
      %s24 = sphi 0, %s43
      %s25 = sphi 0, %s39
      %s26 = sphi 0, %s35
      %s27 = sphi 0, %s24
      %s28 = sphi 0, %s25
      %s29 = sphi 0, %s26
      %s30 = sphi 0, %s27
      %s31 = sphi 0, %s28
      %s32 = sphi 0, %s29
      %s48 = sphi 0, %s50
      %s51 = sphi 0, %s48
      %s52 = sphi 0, %s51
      %s68 = sphi 0, %s52
      %s76 = sphi 0, %s78
      %s79 = sphi 0, %s76
      %s80 = sphi 0, %s79
      %s96 = sphi 0, %s80
      %s102 = sphi 0, %s104
      %s105 = sphi 0, %s102
      %s106 = sphi 0, %s105
      %s122 = sphi 0, %s106
      %s128 = sphi 0, %s130
      %s131 = sphi 0, %s128
      %s132 = sphi 0, %s131
      %s148 = sphi 0, %s132
      %s156 = sphi 0, %s158
      %s159 = sphi 0, %s156
      %s160 = sphi 0, %s159
      %s176 = sphi 0, %s160
    $region4: #{tpu_custom_call.1} parent=1 // loop_header_branch
      %20 = sbr.rel (%p18) target = $region8
    $region5: #{tpu_custom_call.1} parent=1 // loop_body
      %s22 = ssub.s32 %s17, 1
      %s23 = ssub.s32 %s17, 2
      %s33 = sadd.s32 1, %s26
      %p34 = scmp.ge.s32.totalorder %s33, 1
      %s35 = scalar_select %p34, 0, %s33
      %s36 = sadd.s32 1, %s25
      %s37 = scalar_select %p34, %s36, %s25
      %p38 = scmp.ge.s32.totalorder %s37, 1
      %s39 = scalar_select %p38, 0, %s37
      %s40 = sadd.s32 1, %s24
      %s41 = scalar_select %p38, %s40, %s24
      %p42 = scmp.ge.s32.totalorder %s41, 4
      %s43 = scalar_select %p42, 0, %s41
      %s44 = ssub.s32 %s24, %s43
      %s45 = ssub.s32 %s26, %s35
      %s46 = sor.u32 %s44, %s45
      %p47 = scmp.eq.s32.totalorder %s46, 0
      %s49 = sadd.s32 %s48, 1
      %s50 = scalar_select %p47, %s48, %s49
      %p53 = pneg %p47
      %p54 = scmp.eq.s32.totalorder %s17, 3
      %p55 = por %p53, %p54
      %p56 = scmp.ne.s32.totalorder %s48, %s51
      %p57 = scmp.eq.s32.totalorder %s17, 0
      %p58 = por %p56, %p57
      %p59 = scmp.ne.s32.totalorder %s48, %s51
      %p60 = scmp.eq.s32.totalorder %s22, 3
      %p61 = por %p59, %p60
      %p62 = scmp.ne.s32.totalorder %s51, %s52
      %p63 = scmp.eq.s32.totalorder %s22, 0
      %p64 = por %p62, %p63
      %p65 = scmp.ne.s32.totalorder %s51, %s52
      %p66 = scmp.eq.s32.totalorder %s23, 3
      %p67 = por %p65, %p66
      %p69 = scmp.ne.s32.totalorder %s52, %s68
      %p70 = scmp.eq.s32.totalorder %s23, 0
      %p71 = por %p69, %p70
      %s72 = ssub.s32 %s26, %s35
      %s73 = ssub.s32 %s25, %s39
      %s74 = sor.u32 %s72, %s73
      %p75 = scmp.eq.s32.totalorder %s74, 0
      %s77 = sadd.s32 %s76, 1
      %s78 = scalar_select %p75, %s76, %s77
      %p81 = pneg %p75
      %p82 = scmp.eq.s32.totalorder %s17, 3
      %p83 = por %p81, %p82
      %p84 = scmp.ne.s32.totalorder %s76, %s79
      %p85 = scmp.eq.s32.totalorder %s17, 0
      %p86 = por %p84, %p85
      %p87 = scmp.ne.s32.totalorder %s76, %s79
      %p88 = scmp.eq.s32.totalorder %s22, 3
      %p89 = por %p87, %p88
      %p90 = scmp.ne.s32.totalorder %s79, %s80
      %p91 = scmp.eq.s32.totalorder %s22, 0
      %p92 = por %p90, %p91
      %p93 = scmp.ne.s32.totalorder %s79, %s80
      %p94 = scmp.eq.s32.totalorder %s23, 3
      %p95 = por %p93, %p94
      %p97 = scmp.ne.s32.totalorder %s80, %s96
      %p98 = scmp.eq.s32.totalorder %s23, 0
      %p99 = por %p97, %p98
      %s100 = ssub.s32 %s25, %s39
      %p101 = scmp.eq.s32.totalorder %s100, 0
      %s103 = sadd.s32 %s102, 1
      %s104 = scalar_select %p101, %s102, %s103
      %p107 = pneg %p101
      %p108 = scmp.eq.s32.totalorder %s17, 3
      %p109 = por %p107, %p108
      %p110 = scmp.ne.s32.totalorder %s102, %s105
      %p111 = scmp.eq.s32.totalorder %s17, 0
      %p112 = por %p110, %p111
      %p113 = scmp.ne.s32.totalorder %s102, %s105
      %p114 = scmp.eq.s32.totalorder %s22, 3
      %p115 = por %p113, %p114
      %p116 = scmp.ne.s32.totalorder %s105, %s106
      %p117 = scmp.eq.s32.totalorder %s22, 0
      %p118 = por %p116, %p117
      %p119 = scmp.ne.s32.totalorder %s105, %s106
      %p120 = scmp.eq.s32.totalorder %s23, 3
      %p121 = por %p119, %p120
      %p123 = scmp.ne.s32.totalorder %s106, %s122
      %p124 = scmp.eq.s32.totalorder %s23, 0
      %p125 = por %p123, %p124
      %s126 = ssub.s32 %s25, %s39
      %p127 = scmp.eq.s32.totalorder %s126, 0
      %s129 = sadd.s32 %s128, 1
      %s130 = scalar_select %p127, %s128, %s129
      %p133 = pneg %p127
      %p134 = scmp.eq.s32.totalorder %s17, 3
      %p135 = por %p133, %p134
      %p136 = scmp.ne.s32.totalorder %s128, %s131
      %p137 = scmp.eq.s32.totalorder %s17, 0
      %p138 = por %p136, %p137
      %p139 = scmp.ne.s32.totalorder %s128, %s131
      %p140 = scmp.eq.s32.totalorder %s22, 3
      %p141 = por %p139, %p140
      %p142 = scmp.ne.s32.totalorder %s131, %s132
      %p143 = scmp.eq.s32.totalorder %s22, 0
      %p144 = por %p142, %p143
      %p145 = scmp.ne.s32.totalorder %s131, %s132
      %p146 = scmp.eq.s32.totalorder %s23, 3
      %p147 = por %p145, %p146
      %p149 = scmp.ne.s32.totalorder %s132, %s148
      %p150 = scmp.eq.s32.totalorder %s23, 0
      %p151 = por %p149, %p150
      %s152 = ssub.s32 %s24, %s43
      %s153 = ssub.s32 %s25, %s39
      %s154 = sor.u32 %s152, %s153
      %p155 = scmp.eq.s32.totalorder %s154, 0
      %s157 = sadd.s32 %s156, 1
      %s158 = scalar_select %p155, %s156, %s157
      %p161 = pneg %p155
      %p162 = scmp.eq.s32.totalorder %s17, 3
      %p163 = por %p161, %p162
      %p164 = scmp.ne.s32.totalorder %s156, %s159
      %p165 = scmp.eq.s32.totalorder %s17, 0
      %p166 = por %p164, %p165
      %p167 = scmp.ne.s32.totalorder %s156, %s159
      %p168 = scmp.eq.s32.totalorder %s22, 3
      %p169 = por %p167, %p168
      %p170 = scmp.ne.s32.totalorder %s159, %s160
      %p171 = scmp.eq.s32.totalorder %s22, 0
      %p172 = por %p170, %p171
      %p173 = scmp.ne.s32.totalorder %s159, %s160
      %p174 = scmp.eq.s32.totalorder %s23, 3
      %p175 = por %p173, %p174
      %p177 = scmp.ne.s32.totalorder %s160, %s176
      %p178 = scmp.eq.s32.totalorder %s23, 0
      %p179 = por %p177, %p178
      %p180 = scmp.le.s32.totalorder 1, %s17
      %p181 = scmp.lt.s32.totalorder %s17, 5
      %p182 = pnand %p180, %p181
      %p183 = pneg %p182
      // Predicated region
      $region9: #{tpu_custom_call.1} parent=5 // pred_check
        _
      $region10: #{tpu_custom_call.1} parent=5 // pred_check_branch
        %185 = sbr.rel (%p182) target = $region12
      $region11: #{tpu_custom_call.1} parent=5 // pred_region
        %s186 = ssub.s32 %s17, 1
        // Predicated region
        $region13: #{tpu_custom_call.1} parent=11 // pred_check
          %p187 = pneg %p92
        $region14: #{tpu_custom_call.1} parent=11 // pred_check_branch
          %189 = sbr.rel (%p187) target = $region16
        $region15: #{tpu_custom_call.1} parent=11 // pred_region
          %s190 = smul.u32 16, %s29
          %s192 = ssub.s32 1024, 1024
          %193 = vsyncadd [#allocation7], %s192
          %s194 = sadd.s32 %s28, %s190
          %s195 = smul.addr %s194, 64
          %s196 = scalar_lea.hbm %s1, %s195
          %s197 = sshll.u32 [#allocation6], 4
          %s198 = int_to_ptr.vmem [resolvable:$true] %s197
          %203 = dma.hbm_to_vmem [thread:$0]  %s196, 1024, %s198, [#allocation7], 64, 64, 4
        $region16: #{tpu_custom_call.1} parent=11 // pred_fallthru
          _
        // Predicated region
        $region17: #{tpu_custom_call.1} parent=11 // pred_check
          %p204 = pneg %p118
        $region18: #{tpu_custom_call.1} parent=11 // pred_check_branch
          %206 = sbr.rel (%p204) target = $region20
        $region19: #{tpu_custom_call.1} parent=11 // pred_region
          %p207 = scmp.lt.s32.totalorder %s28, 0
          %s208 = scalar_select %p207, %s28, 0
          %s209 = scalar_lea.vmem %s2, %s208
        $region20: #{tpu_custom_call.1} parent=11 // pred_fallthru
          _
        // Predicated region
        $region21: #{tpu_custom_call.1} parent=11 // pred_check
          %p210 = pneg %p144
        $region22: #{tpu_custom_call.1} parent=11 // pred_check_branch
          %212 = sbr.rel (%p210) target = $region24
        $region23: #{tpu_custom_call.1} parent=11 // pred_region
          %p213 = scmp.lt.s32.totalorder %s28, 0
          %s214 = scalar_select %p213, %s28, 0
          %s215 = scalar_lea.vmem %s3, %s214
        $region24: #{tpu_custom_call.1} parent=11 // pred_fallthru
          _
      $region12: #{tpu_custom_call.1} parent=5 // pred_fallthru
        _
      %p216 = scmp.lt.s32.totalorder %s17, 4
      // Predicated region
      $region25: #{tpu_custom_call.1} parent=5 // pred_check
        %p217 = pneg %p216
      $region26: #{tpu_custom_call.1} parent=5 // pred_check_branch
        %219 = sbr.rel (%p217) target = $region28
      $region27: #{tpu_custom_call.1} parent=5 // pred_region
        // Predicated region
        $region29: #{tpu_custom_call.1} parent=27 // pred_check
          %p220 = pneg %p58
        $region30: #{tpu_custom_call.1} parent=27 // pred_check_branch
          %222 = sbr.rel (%p220) target = $region32
        $region31: #{tpu_custom_call.1} parent=27 // pred_region
          %s223 = sand.u32 %s48, 1
          %s224 = scalar_lea.sflag [#allocation4], %s223
          %s225 = sand.u32 %s48, 1
          %s226 = smul.addr %s225, 256
          %s227 = scalar_lea.vmem [#allocation3], %s226
          %s228 = smul.u32 64, %s24
          %s230 = ssub.s32 4096, 4096
          %231 = vsyncadd %s224, %s230
          %s232 = sadd.s32 %s26, %s228
          %s233 = smul.addr %s232, 64
          %s234 = scalar_lea.hbm %s0, %s233
          %s235 = sshll.u32 %s227, 4
          %s236 = int_to_ptr.vmem [resolvable:$true] %s235
          %241 = dma.hbm_to_vmem [thread:$0]  %s234, 4096, %s236, %s224, 64, 64, 4
        $region32: #{tpu_custom_call.1} parent=27 // pred_fallthru
          _
      $region28: #{tpu_custom_call.1} parent=5 // pred_fallthru
        _
      %p242 = scmp.le.s32.totalorder 1, %s17
      %p243 = scmp.lt.s32.totalorder %s17, 5
      %p244 = pnand %p242, %p243
      %p245 = pneg %p244
      // Predicated region
      $region33: #{tpu_custom_call.1} parent=5 // pred_check
        _
      $region34: #{tpu_custom_call.1} parent=5 // pred_check_branch
        %247 = sbr.rel (%p244) target = $region36
      $region35: #{tpu_custom_call.1} parent=5 // pred_region
        %s248 = ssub.s32 %s17, 1
        %s249 = sand.u32 %s51, 1
        %s250 = scalar_lea.sflag [#allocation4], %s249
        %s251 = sand.u32 %s51, 1
        %s252 = smul.addr %s251, 256
        %s253 = scalar_lea.vmem [#allocation3], %s252
        // Predicated region
        $region37: #{tpu_custom_call.1} parent=35 // pred_check
          %p254 = pneg %p64
        $region38: #{tpu_custom_call.1} parent=35 // pred_check_branch
          %256 = sbr.rel (%p254) target = $region40
        $region39: #{tpu_custom_call.1} parent=35 // pred_region
          %257 = dma.done %s250, 4096
        $region40: #{tpu_custom_call.1} parent=35 // pred_fallthru
          _
        // Predicated region
        $region41: #{tpu_custom_call.1} parent=35 // pred_check
          %p258 = pneg %p92
        $region42: #{tpu_custom_call.1} parent=35 // pred_check_branch
          %260 = sbr.rel (%p258) target = $region44
        $region43: #{tpu_custom_call.1} parent=35 // pred_region
          %261 = dma.done [#allocation7], 1024
        $region44: #{tpu_custom_call.1} parent=35 // pred_fallthru
          _
        %s262 = sand.u32 %s51, 1
        %s263 = scalar_lea.sflag [#allocation4], %s262
        %s264 = sand.u32 %s51, 1
        %s265 = smul.addr %s264, 256
        %s266 = scalar_lea.vmem [#allocation3], %s265
        %p267 = pneg %p64
        %p268 = pneg %p61
        %p269 = pneg %p92
        %p270 = pneg %p89
        %p271 = scmp.lt.s32.totalorder %s28, 0
        %s272 = scalar_select %p271, %s28, 0
        %s273 = scalar_lea.vmem %s2, %s272
        %p274 = pneg %p118
        %p275 = pneg %p115
        %p276 = scmp.lt.s32.totalorder %s28, 0
        %s277 = scalar_select %p276, %s28, 0
        %s278 = scalar_lea.vmem %s3, %s277
        %p279 = pneg %p144
        %p280 = pneg %p141
        %p281 = pneg %p172
        %p282 = pneg %p169
        %s283 = sand.u32 %s159, 1
        %s284 = scalar_lea.sflag [#allocation5], %s283
        %s285 = sand.u32 %s159, 1
        %s286 = smul.addr %s285, 256
        %s287 = scalar_lea.vmem [#allocation8], %s286
        %s288 = smul.u32 64, %s27
        %s289 = smul.u32 16, %s29
        %p290 = scmp.lt.s32.totalorder %s28, 0
        %s291 = scalar_select %p290, %s28, 0
        %s292 = scalar_lea.vmem %s2, %s291
        %p293 = scmp.lt.s32.totalorder %s28, 0
        %s294 = scalar_select %p293, %s28, 0
        %s295 = scalar_lea.vmem %s3, %s294
        %s296 = smul.u32 64, %s27
        %p298 = scmp.eq.s32.totalorder %s29, 0
        // Predicated region
        $region45: #{tpu_custom_call.1} parent=35 // pred_check
          %p299 = pneg %p298
        $region46: #{tpu_custom_call.1} parent=35 // pred_check_branch
          %301 = sbr.rel (%p299) target = $region48
        $region47: #{tpu_custom_call.1} parent=35 // pred_region
          %302 = vst [vmem:[#allocation2] sm:$0xff] 0.0
          %303 = vst [vmem:[#allocation2 + $0x8] sm:$0xff] 0.0
          %304 = vst [vmem:[#allocation2 + $0x10] sm:$0xff] 0.0
          %305 = vst [vmem:[#allocation2 + $0x18] sm:$0xff] 0.0
          %306 = vst [vmem:[#allocation2 + $0x20] sm:$0xff] 0.0
          %307 = vst [vmem:[#allocation2 + $0x28] sm:$0xff] 0.0
          %308 = vst [vmem:[#allocation2 + $0x30] sm:$0xff] 0.0
          %309 = vst [vmem:[#allocation2 + $0x38] sm:$0xff] 0.0
          %310 = vst [vmem:[#allocation2 + $0x40] sm:$0xff] 0.0
          %311 = vst [vmem:[#allocation2 + $0x48] sm:$0xff] 0.0
          %312 = vst [vmem:[#allocation2 + $0x50] sm:$0xff] 0.0
          %313 = vst [vmem:[#allocation2 + $0x58] sm:$0xff] 0.0
          %314 = vst [vmem:[#allocation2 + $0x60] sm:$0xff] 0.0
          %315 = vst [vmem:[#allocation2 + $0x68] sm:$0xff] 0.0
          %316 = vst [vmem:[#allocation2 + $0x70] sm:$0xff] 0.0
          %317 = vst [vmem:[#allocation2 + $0x78] sm:$0xff] 0.0
          %318 = vst [vmem:[#allocation2 + $0x80] sm:$0xff] 0.0
          %319 = vst [vmem:[#allocation2 + $0x88] sm:$0xff] 0.0
          %320 = vst [vmem:[#allocation2 + $0x90] sm:$0xff] 0.0
          %321 = vst [vmem:[#allocation2 + $0x98] sm:$0xff] 0.0
          %322 = vst [vmem:[#allocation2 + $0xa0] sm:$0xff] 0.0
          %323 = vst [vmem:[#allocation2 + $0xa8] sm:$0xff] 0.0
          %324 = vst [vmem:[#allocation2 + $0xb0] sm:$0xff] 0.0
          %325 = vst [vmem:[#allocation2 + $0xb8] sm:$0xff] 0.0
          %326 = vst [vmem:[#allocation2 + $0xc0] sm:$0xff] 0.0
          %327 = vst [vmem:[#allocation2 + $0xc8] sm:$0xff] 0.0
          %328 = vst [vmem:[#allocation2 + $0xd0] sm:$0xff] 0.0
          %329 = vst [vmem:[#allocation2 + $0xd8] sm:$0xff] 0.0
          %330 = vst [vmem:[#allocation2 + $0xe0] sm:$0xff] 0.0
          %331 = vst [vmem:[#allocation2 + $0xe8] sm:$0xff] 0.0
          %332 = vst [vmem:[#allocation2 + $0xf0] sm:$0xff] 0.0
          %333 = vst [vmem:[#allocation2 + $0xf8] sm:$0xff] 0.0
          %334 = vst [vmem:[#allocation2 + $0x100] sm:$0xff] 0.0
          %335 = vst [vmem:[#allocation2 + $0x108] sm:$0xff] 0.0
          %336 = vst [vmem:[#allocation2 + $0x110] sm:$0xff] 0.0
          %337 = vst [vmem:[#allocation2 + $0x118] sm:$0xff] 0.0
          %338 = vst [vmem:[#allocation2 + $0x120] sm:$0xff] 0.0
          %339 = vst [vmem:[#allocation2 + $0x128] sm:$0xff] 0.0
          %340 = vst [vmem:[#allocation2 + $0x130] sm:$0xff] 0.0
          %341 = vst [vmem:[#allocation2 + $0x138] sm:$0xff] 0.0
          %342 = vst [vmem:[#allocation2 + $0x140] sm:$0xff] 0.0
          %343 = vst [vmem:[#allocation2 + $0x148] sm:$0xff] 0.0
          %344 = vst [vmem:[#allocation2 + $0x150] sm:$0xff] 0.0
          %345 = vst [vmem:[#allocation2 + $0x158] sm:$0xff] 0.0
          %346 = vst [vmem:[#allocation2 + $0x160] sm:$0xff] 0.0
          %347 = vst [vmem:[#allocation2 + $0x168] sm:$0xff] 0.0
          %348 = vst [vmem:[#allocation2 + $0x170] sm:$0xff] 0.0
          %349 = vst [vmem:[#allocation2 + $0x178] sm:$0xff] 0.0
          %350 = vst [vmem:[#allocation2 + $0x180] sm:$0xff] 0.0
          %351 = vst [vmem:[#allocation2 + $0x188] sm:$0xff] 0.0
          %352 = vst [vmem:[#allocation2 + $0x190] sm:$0xff] 0.0
          %353 = vst [vmem:[#allocation2 + $0x198] sm:$0xff] 0.0
          %354 = vst [vmem:[#allocation2 + $0x1a0] sm:$0xff] 0.0
          %355 = vst [vmem:[#allocation2 + $0x1a8] sm:$0xff] 0.0
          %356 = vst [vmem:[#allocation2 + $0x1b0] sm:$0xff] 0.0
          %357 = vst [vmem:[#allocation2 + $0x1b8] sm:$0xff] 0.0
          %358 = vst [vmem:[#allocation2 + $0x1c0] sm:$0xff] 0.0
          %359 = vst [vmem:[#allocation2 + $0x1c8] sm:$0xff] 0.0
          %360 = vst [vmem:[#allocation2 + $0x1d0] sm:$0xff] 0.0
          %361 = vst [vmem:[#allocation2 + $0x1d8] sm:$0xff] 0.0
          %362 = vst [vmem:[#allocation2 + $0x1e0] sm:$0xff] 0.0
          %363 = vst [vmem:[#allocation2 + $0x1e8] sm:$0xff] 0.0
          %364 = vst [vmem:[#allocation2 + $0x1f0] sm:$0xff] 0.0
          %365 = vst [vmem:[#allocation2 + $0x1f8] sm:$0xff] 0.0
        $region48: #{tpu_custom_call.1} parent=35 // pred_fallthru
          _
        %v366 = vld [vmem:[#allocation2] sm:$0xff]
        %v367 = vld [vmem:[#allocation2 + $0x8] sm:$0xff]
        %v368 = vld [vmem:[#allocation2 + $0x10] sm:$0xff]
        %v369 = vld [vmem:[#allocation2 + $0x18] sm:$0xff]
        %v370 = vld [vmem:[#allocation2 + $0x20] sm:$0xff]
        %v371 = vld [vmem:[#allocation2 + $0x28] sm:$0xff]
        %v372 = vld [vmem:[#allocation2 + $0x30] sm:$0xff]
        %v373 = vld [vmem:[#allocation2 + $0x38] sm:$0xff]
        %v374 = vld [vmem:[#allocation2 + $0x40] sm:$0xff]
        %v375 = vld [vmem:[#allocation2 + $0x48] sm:$0xff]
        %v376 = vld [vmem:[#allocation2 + $0x50] sm:$0xff]
        %v377 = vld [vmem:[#allocation2 + $0x58] sm:$0xff]
        %v378 = vld [vmem:[#allocation2 + $0x60] sm:$0xff]
        %v379 = vld [vmem:[#allocation2 + $0x68] sm:$0xff]
        %v380 = vld [vmem:[#allocation2 + $0x70] sm:$0xff]
        %v381 = vld [vmem:[#allocation2 + $0x78] sm:$0xff]
        %v382 = vld [vmem:[#allocation2 + $0x80] sm:$0xff]
        %v383 = vld [vmem:[#allocation2 + $0x88] sm:$0xff]
        %v384 = vld [vmem:[#allocation2 + $0x90] sm:$0xff]
        %v385 = vld [vmem:[#allocation2 + $0x98] sm:$0xff]
        %v386 = vld [vmem:[#allocation2 + $0xa0] sm:$0xff]
        %v387 = vld [vmem:[#allocation2 + $0xa8] sm:$0xff]
        %v388 = vld [vmem:[#allocation2 + $0xb0] sm:$0xff]
        %v389 = vld [vmem:[#allocation2 + $0xb8] sm:$0xff]
        %v390 = vld [vmem:[#allocation2 + $0xc0] sm:$0xff]
        %v391 = vld [vmem:[#allocation2 + $0xc8] sm:$0xff]
        %v392 = vld [vmem:[#allocation2 + $0xd0] sm:$0xff]
        %v393 = vld [vmem:[#allocation2 + $0xd8] sm:$0xff]
        %v394 = vld [vmem:[#allocation2 + $0xe0] sm:$0xff]
        %v395 = vld [vmem:[#allocation2 + $0xe8] sm:$0xff]
        %v396 = vld [vmem:[#allocation2 + $0xf0] sm:$0xff]
        %v397 = vld [vmem:[#allocation2 + $0xf8] sm:$0xff]
        %v398 = vld [vmem:[#allocation2 + $0x100] sm:$0xff]
        %v399 = vld [vmem:[#allocation2 + $0x108] sm:$0xff]
        %v400 = vld [vmem:[#allocation2 + $0x110] sm:$0xff]
        %v401 = vld [vmem:[#allocation2 + $0x118] sm:$0xff]
        %v402 = vld [vmem:[#allocation2 + $0x120] sm:$0xff]
        %v403 = vld [vmem:[#allocation2 + $0x128] sm:$0xff]
        %v404 = vld [vmem:[#allocation2 + $0x130] sm:$0xff]
        %v405 = vld [vmem:[#allocation2 + $0x138] sm:$0xff]
        %v406 = vld [vmem:[#allocation2 + $0x140] sm:$0xff]
        %v407 = vld [vmem:[#allocation2 + $0x148] sm:$0xff]
        %v408 = vld [vmem:[#allocation2 + $0x150] sm:$0xff]
        %v409 = vld [vmem:[#allocation2 + $0x158] sm:$0xff]
        %v410 = vld [vmem:[#allocation2 + $0x160] sm:$0xff]
        %v411 = vld [vmem:[#allocation2 + $0x168] sm:$0xff]
        %v412 = vld [vmem:[#allocation2 + $0x170] sm:$0xff]
        %v413 = vld [vmem:[#allocation2 + $0x178] sm:$0xff]
        %v414 = vld [vmem:[#allocation2 + $0x180] sm:$0xff]
        %v415 = vld [vmem:[#allocation2 + $0x188] sm:$0xff]
        %v416 = vld [vmem:[#allocation2 + $0x190] sm:$0xff]
        %v417 = vld [vmem:[#allocation2 + $0x198] sm:$0xff]
        %v418 = vld [vmem:[#allocation2 + $0x1a0] sm:$0xff]
        %v419 = vld [vmem:[#allocation2 + $0x1a8] sm:$0xff]
        %v420 = vld [vmem:[#allocation2 + $0x1b0] sm:$0xff]
        %v421 = vld [vmem:[#allocation2 + $0x1b8] sm:$0xff]
        %v422 = vld [vmem:[#allocation2 + $0x1c0] sm:$0xff]
        %v423 = vld [vmem:[#allocation2 + $0x1c8] sm:$0xff]
        %v424 = vld [vmem:[#allocation2 + $0x1d0] sm:$0xff]
        %v425 = vld [vmem:[#allocation2 + $0x1d8] sm:$0xff]
        %v426 = vld [vmem:[#allocation2 + $0x1e0] sm:$0xff]
        %v427 = vld [vmem:[#allocation2 + $0x1e8] sm:$0xff]
        %v428 = vld [vmem:[#allocation2 + $0x1f0] sm:$0xff]
        %v429 = vld [vmem:[#allocation2 + $0x1f8] sm:$0xff]
        %v430 = vld [vmem:[%s253] sm:$0xf]
        %v431 = vld [vmem:[%s253 + $0x4] sm:$0xf]
        %v432 = vld [vmem:[%s253 + $0x8] sm:$0xf]
        %v433 = vld [vmem:[%s253 + $0xc] sm:$0xf]
        %v434 = vld [vmem:[%s253 + $0x10] sm:$0xf]
        %v435 = vld [vmem:[%s253 + $0x14] sm:$0xf]
        %v436 = vld [vmem:[%s253 + $0x18] sm:$0xf]
        %v437 = vld [vmem:[%s253 + $0x1c] sm:$0xf]
        %v438 = vld [vmem:[%s253 + $0x20] sm:$0xf]
        %v439 = vld [vmem:[%s253 + $0x24] sm:$0xf]
        %v440 = vld [vmem:[%s253 + $0x28] sm:$0xf]
        %v441 = vld [vmem:[%s253 + $0x2c] sm:$0xf]
        %v442 = vld [vmem:[%s253 + $0x30] sm:$0xf]
        %v443 = vld [vmem:[%s253 + $0x34] sm:$0xf]
        %v444 = vld [vmem:[%s253 + $0x38] sm:$0xf]
        %v445 = vld [vmem:[%s253 + $0x3c] sm:$0xf]
        %v446 = vld [vmem:[%s253 + $0x40] sm:$0xf]
        %v447 = vld [vmem:[%s253 + $0x44] sm:$0xf]
        %v448 = vld [vmem:[%s253 + $0x48] sm:$0xf]
        %v449 = vld [vmem:[%s253 + $0x4c] sm:$0xf]
        %v450 = vld [vmem:[%s253 + $0x50] sm:$0xf]
        %v451 = vld [vmem:[%s253 + $0x54] sm:$0xf]
        %v452 = vld [vmem:[%s253 + $0x58] sm:$0xf]
        %v453 = vld [vmem:[%s253 + $0x5c] sm:$0xf]
        %v454 = vld [vmem:[%s253 + $0x60] sm:$0xf]
        %v455 = vld [vmem:[%s253 + $0x64] sm:$0xf]
        %v456 = vld [vmem:[%s253 + $0x68] sm:$0xf]
        %v457 = vld [vmem:[%s253 + $0x6c] sm:$0xf]
        %v458 = vld [vmem:[%s253 + $0x70] sm:$0xf]
        %v459 = vld [vmem:[%s253 + $0x74] sm:$0xf]
        %v460 = vld [vmem:[%s253 + $0x78] sm:$0xf]
        %v461 = vld [vmem:[%s253 + $0x7c] sm:$0xf]
        %v462 = vld [vmem:[%s253 + $0x80] sm:$0xf]
        %v463 = vld [vmem:[%s253 + $0x84] sm:$0xf]
        %v464 = vld [vmem:[%s253 + $0x88] sm:$0xf]
        %v465 = vld [vmem:[%s253 + $0x8c] sm:$0xf]
        %v466 = vld [vmem:[%s253 + $0x90] sm:$0xf]
        %v467 = vld [vmem:[%s253 + $0x94] sm:$0xf]
        %v468 = vld [vmem:[%s253 + $0x98] sm:$0xf]
        %v469 = vld [vmem:[%s253 + $0x9c] sm:$0xf]
        %v470 = vld [vmem:[%s253 + $0xa0] sm:$0xf]
        %v471 = vld [vmem:[%s253 + $0xa4] sm:$0xf]
        %v472 = vld [vmem:[%s253 + $0xa8] sm:$0xf]
        %v473 = vld [vmem:[%s253 + $0xac] sm:$0xf]
        %v474 = vld [vmem:[%s253 + $0xb0] sm:$0xf]
        %v475 = vld [vmem:[%s253 + $0xb4] sm:$0xf]
        %v476 = vld [vmem:[%s253 + $0xb8] sm:$0xf]
        %v477 = vld [vmem:[%s253 + $0xbc] sm:$0xf]
        %v478 = vld [vmem:[%s253 + $0xc0] sm:$0xf]
        %v479 = vld [vmem:[%s253 + $0xc4] sm:$0xf]
        %v480 = vld [vmem:[%s253 + $0xc8] sm:$0xf]
        %v481 = vld [vmem:[%s253 + $0xcc] sm:$0xf]
        %v482 = vld [vmem:[%s253 + $0xd0] sm:$0xf]
        %v483 = vld [vmem:[%s253 + $0xd4] sm:$0xf]
        %v484 = vld [vmem:[%s253 + $0xd8] sm:$0xf]
        %v485 = vld [vmem:[%s253 + $0xdc] sm:$0xf]
        %v486 = vld [vmem:[%s253 + $0xe0] sm:$0xf]
        %v487 = vld [vmem:[%s253 + $0xe4] sm:$0xf]
        %v488 = vld [vmem:[%s253 + $0xe8] sm:$0xf]
        %v489 = vld [vmem:[%s253 + $0xec] sm:$0xf]
        %v490 = vld [vmem:[%s253 + $0xf0] sm:$0xf]
        %v491 = vld [vmem:[%s253 + $0xf4] sm:$0xf]
        %v492 = vld [vmem:[%s253 + $0xf8] sm:$0xf]
        %v493 = vld [vmem:[%s253 + $0xfc] sm:$0xf]
        %v494 = vld [vmem:[#allocation6] sm:$0xf]
        %v495 = vld [vmem:[#allocation6 + $0x4] sm:$0xf]
        %v496 = vld [vmem:[#allocation6 + $0x8] sm:$0xf]
        %v497 = vld [vmem:[#allocation6 + $0xc] sm:$0xf]
        %v498 = vld [vmem:[#allocation6 + $0x10] sm:$0xf]
        %v499 = vld [vmem:[#allocation6 + $0x14] sm:$0xf]
        %v500 = vld [vmem:[#allocation6 + $0x18] sm:$0xf]
        %v501 = vld [vmem:[#allocation6 + $0x1c] sm:$0xf]
        %v502 = vld [vmem:[#allocation6 + $0x20] sm:$0xf]
        %v503 = vld [vmem:[#allocation6 + $0x24] sm:$0xf]
        %v504 = vld [vmem:[#allocation6 + $0x28] sm:$0xf]
        %v505 = vld [vmem:[#allocation6 + $0x2c] sm:$0xf]
        %v506 = vld [vmem:[#allocation6 + $0x30] sm:$0xf]
        %v507 = vld [vmem:[#allocation6 + $0x34] sm:$0xf]
        %v508 = vld [vmem:[#allocation6 + $0x38] sm:$0xf]
        %v509 = vld [vmem:[#allocation6 + $0x3c] sm:$0xf]
        %v574 = vunpack.c.l.b16 %v430
        %v575 = vunpack.c.l.b16 %v431
        %v576 = vunpack.c.l.b16 %v432
        %v577 = vunpack.c.l.b16 %v433
        %v578 = vunpack.c.l.b16 %v434
        %v579 = vunpack.c.l.b16 %v435
        %v580 = vunpack.c.l.b16 %v436
        %v581 = vunpack.c.l.b16 %v437
        %v582 = vunpack.c.l.b16 %v438
        %v583 = vunpack.c.l.b16 %v439
        %v584 = vunpack.c.l.b16 %v440
        %v585 = vunpack.c.l.b16 %v441
        %v586 = vunpack.c.l.b16 %v442
        %v587 = vunpack.c.l.b16 %v443
        %v588 = vunpack.c.l.b16 %v444
        %v589 = vunpack.c.l.b16 %v445
        %v590 = vunpack.c.l.b16 %v446
        %v591 = vunpack.c.l.b16 %v447
        %v592 = vunpack.c.l.b16 %v448
        %v593 = vunpack.c.l.b16 %v449
        %v594 = vunpack.c.l.b16 %v450
        %v595 = vunpack.c.l.b16 %v451
        %v596 = vunpack.c.l.b16 %v452
        %v597 = vunpack.c.l.b16 %v453
        %v598 = vunpack.c.l.b16 %v454
        %v599 = vunpack.c.l.b16 %v455
        %v600 = vunpack.c.l.b16 %v456
        %v601 = vunpack.c.l.b16 %v457
        %v602 = vunpack.c.l.b16 %v458
        %v603 = vunpack.c.l.b16 %v459
        %v604 = vunpack.c.l.b16 %v460
        %v605 = vunpack.c.l.b16 %v461
        %v606 = vunpack.c.l.b16 %v462
        %v607 = vunpack.c.l.b16 %v463
        %v608 = vunpack.c.l.b16 %v464
        %v609 = vunpack.c.l.b16 %v465
        %v610 = vunpack.c.l.b16 %v466
        %v611 = vunpack.c.l.b16 %v467
        %v612 = vunpack.c.l.b16 %v468
        %v613 = vunpack.c.l.b16 %v469
        %v614 = vunpack.c.l.b16 %v470
        %v615 = vunpack.c.l.b16 %v471
        %v616 = vunpack.c.l.b16 %v472
        %v617 = vunpack.c.l.b16 %v473
        %v618 = vunpack.c.l.b16 %v474
        %v619 = vunpack.c.l.b16 %v475
        %v620 = vunpack.c.l.b16 %v476
        %v621 = vunpack.c.l.b16 %v477
        %v622 = vunpack.c.l.b16 %v478
        %v623 = vunpack.c.l.b16 %v479
        %v624 = vunpack.c.l.b16 %v480
        %v625 = vunpack.c.l.b16 %v481
        %v626 = vunpack.c.l.b16 %v482
        %v627 = vunpack.c.l.b16 %v483
        %v628 = vunpack.c.l.b16 %v484
        %v629 = vunpack.c.l.b16 %v485
        %v630 = vunpack.c.l.b16 %v486
        %v631 = vunpack.c.l.b16 %v487
        %v632 = vunpack.c.l.b16 %v488
        %v633 = vunpack.c.l.b16 %v489
        %v634 = vunpack.c.l.b16 %v490
        %v635 = vunpack.c.l.b16 %v491
        %v636 = vunpack.c.l.b16 %v492
        %v637 = vunpack.c.l.b16 %v493
        %v638 = vpack.c.b16 %v575, %v574
        %v639 = vpack.c.b16 %v577, %v576
        %v640 = vpack.c.b16 %v579, %v578
        %v641 = vpack.c.b16 %v581, %v580
        %v642 = vpack.c.b16 %v583, %v582
        %v643 = vpack.c.b16 %v585, %v584
        %v644 = vpack.c.b16 %v587, %v586
        %v645 = vpack.c.b16 %v589, %v588
        %v646 = vpack.c.b16 %v591, %v590
        %v647 = vpack.c.b16 %v593, %v592
        %v648 = vpack.c.b16 %v595, %v594
        %v649 = vpack.c.b16 %v597, %v596
        %v650 = vpack.c.b16 %v599, %v598
        %v651 = vpack.c.b16 %v601, %v600
        %v652 = vpack.c.b16 %v603, %v602
        %v653 = vpack.c.b16 %v605, %v604
        %v654 = vpack.c.b16 %v607, %v606
        %v655 = vpack.c.b16 %v609, %v608
        %v656 = vpack.c.b16 %v611, %v610
        %v657 = vpack.c.b16 %v613, %v612
        %v658 = vpack.c.b16 %v615, %v614
        %v659 = vpack.c.b16 %v617, %v616
        %v660 = vpack.c.b16 %v619, %v618
        %v661 = vpack.c.b16 %v621, %v620
        %v662 = vpack.c.b16 %v623, %v622
        %v663 = vpack.c.b16 %v625, %v624
        %v664 = vpack.c.b16 %v627, %v626
        %v665 = vpack.c.b16 %v629, %v628
        %v666 = vpack.c.b16 %v631, %v630
        %v667 = vpack.c.b16 %v633, %v632
        %v668 = vpack.c.b16 %v635, %v634
        %v669 = vpack.c.b16 %v637, %v636
        %v718 = vunpack.c.l.b16 %v494
        %v719 = vunpack.c.l.b16 %v495
        %v720 = vunpack.c.l.b16 %v496
        %v721 = vunpack.c.l.b16 %v497
        %v722 = vunpack.c.l.b16 %v498
        %v723 = vunpack.c.l.b16 %v499
        %v724 = vunpack.c.l.b16 %v500
        %v725 = vunpack.c.l.b16 %v501
        %v726 = vunpack.c.l.b16 %v502
        %v727 = vunpack.c.l.b16 %v503
        %v728 = vunpack.c.l.b16 %v504
        %v729 = vunpack.c.l.b16 %v505
        %v730 = vunpack.c.l.b16 %v506
        %v731 = vunpack.c.l.b16 %v507
        %v732 = vunpack.c.l.b16 %v508
        %v733 = vunpack.c.l.b16 %v509
        %v734 = vpack.c.b16 %v719, %v718
        %v735 = vpack.c.b16 %v721, %v720
        %v736 = vpack.c.b16 %v723, %v722
        %v737 = vpack.c.b16 %v725, %v724
        %v738 = vpack.c.b16 %v727, %v726
        %v739 = vpack.c.b16 %v729, %v728
        %v740 = vpack.c.b16 %v731, %v730
        %v741 = vpack.c.b16 %v733, %v732
        %750 = vmatprep.subr.bf16.mxu0 0
        %751 = vmatpush1.bf16.msra.mxu0 %v734
        %752 = vmatprep.subr.bf16.mxu0 0
        %753 = vmatpush1.bf16.msra.mxu0 %v735
        %754 = vmatprep.subr.bf16.mxu0 0
        %755 = vmatpush1.bf16.msra.mxu0 %v736
        %756 = vmatprep.subr.bf16.mxu0 0
        %757 = vmatpush1.bf16.msra.mxu0 %v737
        %758 = vmatprep.subr.bf16.mxu0 0
        %759 = vmatpush1.bf16.msra.mxu0 %v738
        %760 = vmatprep.subr.bf16.mxu0 0
        %761 = vmatpush1.bf16.msra.mxu0 %v739
        %762 = vmatprep.subr.bf16.mxu0 0
        %763 = vmatpush1.bf16.msra.mxu0 %v740
        %764 = vmatprep.subr.bf16.mxu0 0
        %765 = vmatpush1.bf16.msra.mxu0 %v741
        %766 = vmatprep.subr.bf16.mxu0 0
        %767 = vmatpush1.bf16.msra.mxu0 0
        %768 = vmatprep.subr.bf16.mxu0 0
        %769 = vmatpush1.bf16.msra.mxu0 0
        %770 = vmatprep.subr.bf16.mxu0 0
        %771 = vmatpush1.bf16.msra.mxu0 0
        %772 = vmatprep.subr.bf16.mxu0 0
        %773 = vmatpush1.bf16.msra.mxu0 0
        %774 = vmatprep.subr.bf16.mxu0 0
        %775 = vmatpush1.bf16.msra.mxu0 0
        %776 = vmatprep.subr.bf16.mxu0 0
        %777 = vmatpush1.bf16.msra.mxu0 0
        %778 = vmatprep.subr.bf16.mxu0 0
        %779 = vmatpush1.bf16.msra.mxu0 0
        %780 = vmatprep.subr.bf16.mxu0 0
        %781 = vmatpush1.bf16.msra.mxu0 0
        %782 = vmatprep.mubr.bf16.mxu0 0
        %783 = vmatmul.mubr.bf16.gmra.mrb[0].mxu0 %v638
        %v784 = vpop.f32.mrb[0].mxu0
        %v785 = vadd.f32 0.0, %v784
        %v786 = vpop.f32.mrb[0].mxu0
        %v787 = vpop.f32.mrb[0].mxu0
        %v788 = vadd.f32 0.0, %v787
        %v789 = vpop.f32.mrb[0].mxu0
        %790 = vmatprep.mubr.bf16.mxu0 0
        %791 = vmatmul.mubr.bf16.gmra.mrb[0].mxu0 %v639
        %v792 = vpop.f32.mrb[0].mxu0
        %v793 = vadd.f32 0.0, %v792
        %v794 = vpop.f32.mrb[0].mxu0
        %v795 = vpop.f32.mrb[0].mxu0
        %v796 = vadd.f32 0.0, %v795
        %v797 = vpop.f32.mrb[0].mxu0
        %798 = vmatprep.mubr.bf16.mxu0 0
        %799 = vmatmul.mubr.bf16.gmra.mrb[0].mxu0 %v640
        %v800 = vpop.f32.mrb[0].mxu0
        %v801 = vadd.f32 0.0, %v800
        %v802 = vpop.f32.mrb[0].mxu0
        %v803 = vpop.f32.mrb[0].mxu0
        %v804 = vadd.f32 0.0, %v803
        %v805 = vpop.f32.mrb[0].mxu0
        %806 = vmatprep.mubr.bf16.mxu0 0
        %807 = vmatmul.mubr.bf16.gmra.mrb[0].mxu0 %v641
        %v808 = vpop.f32.mrb[0].mxu0
        %v809 = vadd.f32 0.0, %v808
        %v810 = vpop.f32.mrb[0].mxu0
        %v811 = vpop.f32.mrb[0].mxu0
        %v812 = vadd.f32 0.0, %v811
        %v813 = vpop.f32.mrb[0].mxu0
        %814 = vmatprep.mubr.bf16.mxu0 0
        %815 = vmatmul.mubr.bf16.gmra.mrb[0].mxu0 %v642
        %v816 = vpop.f32.mrb[0].mxu0
        %v817 = vadd.f32 0.0, %v816
        %v818 = vpop.f32.mrb[0].mxu0
        %v819 = vpop.f32.mrb[0].mxu0
        %v820 = vadd.f32 0.0, %v819
        %v821 = vpop.f32.mrb[0].mxu0
        %822 = vmatprep.mubr.bf16.mxu0 0
        %823 = vmatmul.mubr.bf16.gmra.mrb[0].mxu0 %v643
        %v824 = vpop.f32.mrb[0].mxu0
        %v825 = vadd.f32 0.0, %v824
        %v826 = vpop.f32.mrb[0].mxu0
        %v827 = vpop.f32.mrb[0].mxu0
        %v828 = vadd.f32 0.0, %v827
        %v829 = vpop.f32.mrb[0].mxu0
        %830 = vmatprep.mubr.bf16.mxu0 0
        %831 = vmatmul.mubr.bf16.gmra.mrb[0].mxu0 %v644
        %v832 = vpop.f32.mrb[0].mxu0
        %v833 = vadd.f32 0.0, %v832
        %v834 = vpop.f32.mrb[0].mxu0
        %v835 = vpop.f32.mrb[0].mxu0
        %v836 = vadd.f32 0.0, %v835
        %v837 = vpop.f32.mrb[0].mxu0
        %838 = vmatprep.mubr.bf16.mxu0 0
        %839 = vmatmul.mubr.bf16.gmra.mrb[0].mxu0 %v645
        %v840 = vpop.f32.mrb[0].mxu0
        %v841 = vadd.f32 0.0, %v840
        %v842 = vpop.f32.mrb[0].mxu0
        %v843 = vpop.f32.mrb[0].mxu0
        %v844 = vadd.f32 0.0, %v843
        %v845 = vpop.f32.mrb[0].mxu0
        %846 = vmatprep.mubr.bf16.mxu0 0
        %847 = vmatmul.mubr.bf16.gmra.mrb[0].mxu0 %v646
        %v848 = vpop.f32.mrb[0].mxu0
        %v849 = vadd.f32 0.0, %v848
        %v850 = vpop.f32.mrb[0].mxu0
        %v851 = vpop.f32.mrb[0].mxu0
        %v852 = vadd.f32 0.0, %v851
        %v853 = vpop.f32.mrb[0].mxu0
        %854 = vmatprep.mubr.bf16.mxu0 0
        %855 = vmatmul.mubr.bf16.gmra.mrb[0].mxu0 %v647
        %v856 = vpop.f32.mrb[0].mxu0
        %v857 = vadd.f32 0.0, %v856
        %v858 = vpop.f32.mrb[0].mxu0
        %v859 = vpop.f32.mrb[0].mxu0
        %v860 = vadd.f32 0.0, %v859
        %v861 = vpop.f32.mrb[0].mxu0
        %862 = vmatprep.mubr.bf16.mxu0 0
        %863 = vmatmul.mubr.bf16.gmra.mrb[0].mxu0 %v648
        %v864 = vpop.f32.mrb[0].mxu0
        %v865 = vadd.f32 0.0, %v864
        %v866 = vpop.f32.mrb[0].mxu0
        %v867 = vpop.f32.mrb[0].mxu0
        %v868 = vadd.f32 0.0, %v867
        %v869 = vpop.f32.mrb[0].mxu0
        %870 = vmatprep.mubr.bf16.mxu0 0
        %871 = vmatmul.mubr.bf16.gmra.mrb[0].mxu0 %v649
        %v872 = vpop.f32.mrb[0].mxu0
        %v873 = vadd.f32 0.0, %v872
        %v874 = vpop.f32.mrb[0].mxu0
        %v875 = vpop.f32.mrb[0].mxu0
        %v876 = vadd.f32 0.0, %v875
        %v877 = vpop.f32.mrb[0].mxu0
        %878 = vmatprep.mubr.bf16.mxu0 0
        %879 = vmatmul.mubr.bf16.gmra.mrb[0].mxu0 %v650
        %v880 = vpop.f32.mrb[0].mxu0
        %v881 = vadd.f32 0.0, %v880
        %v882 = vpop.f32.mrb[0].mxu0
        %v883 = vpop.f32.mrb[0].mxu0
        %v884 = vadd.f32 0.0, %v883
        %v885 = vpop.f32.mrb[0].mxu0
        %886 = vmatprep.mubr.bf16.mxu0 0
        %887 = vmatmul.mubr.bf16.gmra.mrb[0].mxu0 %v651
        %v888 = vpop.f32.mrb[0].mxu0
        %v889 = vadd.f32 0.0, %v888
        %v890 = vpop.f32.mrb[0].mxu0
        %v891 = vpop.f32.mrb[0].mxu0
        %v892 = vadd.f32 0.0, %v891
        %v893 = vpop.f32.mrb[0].mxu0
        %894 = vmatprep.mubr.bf16.mxu0 0
        %895 = vmatmul.mubr.bf16.gmra.mrb[0].mxu0 %v652
        %v896 = vpop.f32.mrb[0].mxu0
        %v897 = vadd.f32 0.0, %v896
        %v898 = vpop.f32.mrb[0].mxu0
        %v899 = vpop.f32.mrb[0].mxu0
        %v900 = vadd.f32 0.0, %v899
        %v901 = vpop.f32.mrb[0].mxu0
        %902 = vmatprep.mubr.bf16.mxu0 0
        %903 = vmatmul.mubr.bf16.gmra.mrb[0].mxu0 %v653
        %v904 = vpop.f32.mrb[0].mxu0
        %v905 = vadd.f32 0.0, %v904
        %v906 = vpop.f32.mrb[0].mxu0
        %v907 = vpop.f32.mrb[0].mxu0
        %v908 = vadd.f32 0.0, %v907
        %v909 = vpop.f32.mrb[0].mxu0
        %910 = vmatprep.mubr.bf16.mxu0 0
        %911 = vmatmul.mubr.bf16.gmra.mrb[0].mxu0 %v654
        %v912 = vpop.f32.mrb[0].mxu0
        %v913 = vadd.f32 0.0, %v912
        %v914 = vpop.f32.mrb[0].mxu0
        %v915 = vpop.f32.mrb[0].mxu0
        %v916 = vadd.f32 0.0, %v915
        %v917 = vpop.f32.mrb[0].mxu0
        %918 = vmatprep.mubr.bf16.mxu0 0
        %919 = vmatmul.mubr.bf16.gmra.mrb[0].mxu0 %v655
        %v920 = vpop.f32.mrb[0].mxu0
        %v921 = vadd.f32 0.0, %v920
        %v922 = vpop.f32.mrb[0].mxu0
        %v923 = vpop.f32.mrb[0].mxu0
        %v924 = vadd.f32 0.0, %v923
        %v925 = vpop.f32.mrb[0].mxu0
        %926 = vmatprep.mubr.bf16.mxu0 0
        %927 = vmatmul.mubr.bf16.gmra.mrb[0].mxu0 %v656
        %v928 = vpop.f32.mrb[0].mxu0
        %v929 = vadd.f32 0.0, %v928
        %v930 = vpop.f32.mrb[0].mxu0
        %v931 = vpop.f32.mrb[0].mxu0
        %v932 = vadd.f32 0.0, %v931
        %v933 = vpop.f32.mrb[0].mxu0
        %934 = vmatprep.mubr.bf16.mxu0 0
        %935 = vmatmul.mubr.bf16.gmra.mrb[0].mxu0 %v657
        %v936 = vpop.f32.mrb[0].mxu0
        %v937 = vadd.f32 0.0, %v936
        %v938 = vpop.f32.mrb[0].mxu0
        %v939 = vpop.f32.mrb[0].mxu0
        %v940 = vadd.f32 0.0, %v939
        %v941 = vpop.f32.mrb[0].mxu0
        %942 = vmatprep.mubr.bf16.mxu0 0
        %943 = vmatmul.mubr.bf16.gmra.mrb[0].mxu0 %v658
        %v944 = vpop.f32.mrb[0].mxu0
        %v945 = vadd.f32 0.0, %v944
        %v946 = vpop.f32.mrb[0].mxu0
        %v947 = vpop.f32.mrb[0].mxu0
        %v948 = vadd.f32 0.0, %v947
        %v949 = vpop.f32.mrb[0].mxu0
        %950 = vmatprep.mubr.bf16.mxu0 0
        %951 = vmatmul.mubr.bf16.gmra.mrb[0].mxu0 %v659
        %v952 = vpop.f32.mrb[0].mxu0
        %v953 = vadd.f32 0.0, %v952
        %v954 = vpop.f32.mrb[0].mxu0
        %v955 = vpop.f32.mrb[0].mxu0
        %v956 = vadd.f32 0.0, %v955
        %v957 = vpop.f32.mrb[0].mxu0
        %958 = vmatprep.mubr.bf16.mxu0 0
        %959 = vmatmul.mubr.bf16.gmra.mrb[0].mxu0 %v660
        %v960 = vpop.f32.mrb[0].mxu0
        %v961 = vadd.f32 0.0, %v960
        %v962 = vpop.f32.mrb[0].mxu0
        %v963 = vpop.f32.mrb[0].mxu0
        %v964 = vadd.f32 0.0, %v963
        %v965 = vpop.f32.mrb[0].mxu0
        %966 = vmatprep.mubr.bf16.mxu0 0
        %967 = vmatmul.mubr.bf16.gmra.mrb[0].mxu0 %v661
        %v968 = vpop.f32.mrb[0].mxu0
        %v969 = vadd.f32 0.0, %v968
        %v970 = vpop.f32.mrb[0].mxu0
        %v971 = vpop.f32.mrb[0].mxu0
        %v972 = vadd.f32 0.0, %v971
        %v973 = vpop.f32.mrb[0].mxu0
        %974 = vmatprep.mubr.bf16.mxu0 0
        %975 = vmatmul.mubr.bf16.gmra.mrb[0].mxu0 %v662
        %v976 = vpop.f32.mrb[0].mxu0
        %v977 = vadd.f32 0.0, %v976
        %v978 = vpop.f32.mrb[0].mxu0
        %v979 = vpop.f32.mrb[0].mxu0
        %v980 = vadd.f32 0.0, %v979
        %v981 = vpop.f32.mrb[0].mxu0
        %982 = vmatprep.mubr.bf16.mxu0 0
        %983 = vmatmul.mubr.bf16.gmra.mrb[0].mxu0 %v663
        %v984 = vpop.f32.mrb[0].mxu0
        %v985 = vadd.f32 0.0, %v984
        %v986 = vpop.f32.mrb[0].mxu0
        %v987 = vpop.f32.mrb[0].mxu0
        %v988 = vadd.f32 0.0, %v987
        %v989 = vpop.f32.mrb[0].mxu0
        %990 = vmatprep.mubr.bf16.mxu0 0
        %991 = vmatmul.mubr.bf16.gmra.mrb[0].mxu0 %v664
        %v992 = vpop.f32.mrb[0].mxu0
        %v993 = vadd.f32 0.0, %v992
        %v994 = vpop.f32.mrb[0].mxu0
        %v995 = vpop.f32.mrb[0].mxu0
        %v996 = vadd.f32 0.0, %v995
        %v997 = vpop.f32.mrb[0].mxu0
        %998 = vmatprep.mubr.bf16.mxu0 0
        %999 = vmatmul.mubr.bf16.gmra.mrb[0].mxu0 %v665
        %v1000 = vpop.f32.mrb[0].mxu0
        %v1001 = vadd.f32 0.0, %v1000
        %v1002 = vpop.f32.mrb[0].mxu0
        %v1003 = vpop.f32.mrb[0].mxu0
        %v1004 = vadd.f32 0.0, %v1003
        %v1005 = vpop.f32.mrb[0].mxu0
        %1006 = vmatprep.mubr.bf16.mxu0 0
        %1007 = vmatmul.mubr.bf16.gmra.mrb[0].mxu0 %v666
        %v1008 = vpop.f32.mrb[0].mxu0
        %v1009 = vadd.f32 0.0, %v1008
        %v1010 = vpop.f32.mrb[0].mxu0
        %v1011 = vpop.f32.mrb[0].mxu0
        %v1012 = vadd.f32 0.0, %v1011
        %v1013 = vpop.f32.mrb[0].mxu0
        %1014 = vmatprep.mubr.bf16.mxu0 0
        %1015 = vmatmul.mubr.bf16.gmra.mrb[0].mxu0 %v667
        %v1016 = vpop.f32.mrb[0].mxu0
        %v1017 = vadd.f32 0.0, %v1016
        %v1018 = vpop.f32.mrb[0].mxu0
        %v1019 = vpop.f32.mrb[0].mxu0
        %v1020 = vadd.f32 0.0, %v1019
        %v1021 = vpop.f32.mrb[0].mxu0
        %1022 = vmatprep.mubr.bf16.mxu0 0
        %1023 = vmatmul.mubr.bf16.gmra.mrb[0].mxu0 %v668
        %v1024 = vpop.f32.mrb[0].mxu0
        %v1025 = vadd.f32 0.0, %v1024
        %v1026 = vpop.f32.mrb[0].mxu0
        %v1027 = vpop.f32.mrb[0].mxu0
        %v1028 = vadd.f32 0.0, %v1027
        %v1029 = vpop.f32.mrb[0].mxu0
        %1030 = vmatprep.mubr.bf16.mxu0 0
        %1031 = vmatmul.mubr.bf16.gmra.mrb[0].mxu0 %v669
        %v1032 = vpop.f32.mrb[0].mxu0
        %v1033 = vadd.f32 0.0, %v1032
        %v1034 = vpop.f32.mrb[0].mxu0
        %v1035 = vpop.f32.mrb[0].mxu0
        %v1036 = vadd.f32 0.0, %v1035
        %v1037 = vpop.f32.mrb[0].mxu0
        %1038 = vdwg.mxu0
        %v1039 = vadd.f32 %v366, %v785
        %v1040 = vadd.f32 %v367, %v788
        %v1041 = vadd.f32 %v368, %v793
        %v1042 = vadd.f32 %v369, %v796
        %v1043 = vadd.f32 %v370, %v801
        %v1044 = vadd.f32 %v371, %v804
        %v1045 = vadd.f32 %v372, %v809
        %v1046 = vadd.f32 %v373, %v812
        %v1047 = vadd.f32 %v374, %v817
        %v1048 = vadd.f32 %v375, %v820
        %v1049 = vadd.f32 %v376, %v825
        %v1050 = vadd.f32 %v377, %v828
        %v1051 = vadd.f32 %v378, %v833
        %v1052 = vadd.f32 %v379, %v836
        %v1053 = vadd.f32 %v380, %v841
        %v1054 = vadd.f32 %v381, %v844
        %v1055 = vadd.f32 %v382, %v849
        %v1056 = vadd.f32 %v383, %v852
        %v1057 = vadd.f32 %v384, %v857
        %v1058 = vadd.f32 %v385, %v860
        %v1059 = vadd.f32 %v386, %v865
        %v1060 = vadd.f32 %v387, %v868
        %v1061 = vadd.f32 %v388, %v873
        %v1062 = vadd.f32 %v389, %v876
        %v1063 = vadd.f32 %v390, %v881
        %v1064 = vadd.f32 %v391, %v884
        %v1065 = vadd.f32 %v392, %v889
        %v1066 = vadd.f32 %v393, %v892
        %v1067 = vadd.f32 %v394, %v897
        %v1068 = vadd.f32 %v395, %v900
        %v1069 = vadd.f32 %v396, %v905
        %v1070 = vadd.f32 %v397, %v908
        %v1071 = vadd.f32 %v398, %v913
        %v1072 = vadd.f32 %v399, %v916
        %v1073 = vadd.f32 %v400, %v921
        %v1074 = vadd.f32 %v401, %v924
        %v1075 = vadd.f32 %v402, %v929
        %v1076 = vadd.f32 %v403, %v932
        %v1077 = vadd.f32 %v404, %v937
        %v1078 = vadd.f32 %v405, %v940
        %v1079 = vadd.f32 %v406, %v945
        %v1080 = vadd.f32 %v407, %v948
        %v1081 = vadd.f32 %v408, %v953
        %v1082 = vadd.f32 %v409, %v956
        %v1083 = vadd.f32 %v410, %v961
        %v1084 = vadd.f32 %v411, %v964
        %v1085 = vadd.f32 %v412, %v969
        %v1086 = vadd.f32 %v413, %v972
        %v1087 = vadd.f32 %v414, %v977
        %v1088 = vadd.f32 %v415, %v980
        %v1089 = vadd.f32 %v416, %v985
        %v1090 = vadd.f32 %v417, %v988
        %v1091 = vadd.f32 %v418, %v993
        %v1092 = vadd.f32 %v419, %v996
        %v1093 = vadd.f32 %v420, %v1001
        %v1094 = vadd.f32 %v421, %v1004
        %v1095 = vadd.f32 %v422, %v1009
        %v1096 = vadd.f32 %v423, %v1012
        %v1097 = vadd.f32 %v424, %v1017
        %v1098 = vadd.f32 %v425, %v1020
        %v1099 = vadd.f32 %v426, %v1025
        %v1100 = vadd.f32 %v427, %v1028
        %v1101 = vadd.f32 %v428, %v1033
        %v1102 = vadd.f32 %v429, %v1036
        %1103 = vst [vmem:[#allocation2] sm:$0xff] %v1039
        %1104 = vst [vmem:[#allocation2 + $0x8] sm:$0xff] %v1040
        %1105 = vst [vmem:[#allocation2 + $0x10] sm:$0xff] %v1041
        %1106 = vst [vmem:[#allocation2 + $0x18] sm:$0xff] %v1042
        %1107 = vst [vmem:[#allocation2 + $0x20] sm:$0xff] %v1043
        %1108 = vst [vmem:[#allocation2 + $0x28] sm:$0xff] %v1044
        %1109 = vst [vmem:[#allocation2 + $0x30] sm:$0xff] %v1045
        %1110 = vst [vmem:[#allocation2 + $0x38] sm:$0xff] %v1046
        %1111 = vst [vmem:[#allocation2 + $0x40] sm:$0xff] %v1047
        %1112 = vst [vmem:[#allocation2 + $0x48] sm:$0xff] %v1048
        %1113 = vst [vmem:[#allocation2 + $0x50] sm:$0xff] %v1049
        %1114 = vst [vmem:[#allocation2 + $0x58] sm:$0xff] %v1050
        %1115 = vst [vmem:[#allocation2 + $0x60] sm:$0xff] %v1051
        %1116 = vst [vmem:[#allocation2 + $0x68] sm:$0xff] %v1052
        %1117 = vst [vmem:[#allocation2 + $0x70] sm:$0xff] %v1053
        %1118 = vst [vmem:[#allocation2 + $0x78] sm:$0xff] %v1054
        %1119 = vst [vmem:[#allocation2 + $0x80] sm:$0xff] %v1055
        %1120 = vst [vmem:[#allocation2 + $0x88] sm:$0xff] %v1056
        %1121 = vst [vmem:[#allocation2 + $0x90] sm:$0xff] %v1057
        %1122 = vst [vmem:[#allocation2 + $0x98] sm:$0xff] %v1058
        %1123 = vst [vmem:[#allocation2 + $0xa0] sm:$0xff] %v1059
        %1124 = vst [vmem:[#allocation2 + $0xa8] sm:$0xff] %v1060
        %1125 = vst [vmem:[#allocation2 + $0xb0] sm:$0xff] %v1061
        %1126 = vst [vmem:[#allocation2 + $0xb8] sm:$0xff] %v1062
        %1127 = vst [vmem:[#allocation2 + $0xc0] sm:$0xff] %v1063
        %1128 = vst [vmem:[#allocation2 + $0xc8] sm:$0xff] %v1064
        %1129 = vst [vmem:[#allocation2 + $0xd0] sm:$0xff] %v1065
        %1130 = vst [vmem:[#allocation2 + $0xd8] sm:$0xff] %v1066
        %1131 = vst [vmem:[#allocation2 + $0xe0] sm:$0xff] %v1067
        %1132 = vst [vmem:[#allocation2 + $0xe8] sm:$0xff] %v1068
        %1133 = vst [vmem:[#allocation2 + $0xf0] sm:$0xff] %v1069
        %1134 = vst [vmem:[#allocation2 + $0xf8] sm:$0xff] %v1070
        %1135 = vst [vmem:[#allocation2 + $0x100] sm:$0xff] %v1071
        %1136 = vst [vmem:[#allocation2 + $0x108] sm:$0xff] %v1072
        %1137 = vst [vmem:[#allocation2 + $0x110] sm:$0xff] %v1073
        %1138 = vst [vmem:[#allocation2 + $0x118] sm:$0xff] %v1074
        %1139 = vst [vmem:[#allocation2 + $0x120] sm:$0xff] %v1075
        %1140 = vst [vmem:[#allocation2 + $0x128] sm:$0xff] %v1076
        %1141 = vst [vmem:[#allocation2 + $0x130] sm:$0xff] %v1077
        %1142 = vst [vmem:[#allocation2 + $0x138] sm:$0xff] %v1078
        %1143 = vst [vmem:[#allocation2 + $0x140] sm:$0xff] %v1079
        %1144 = vst [vmem:[#allocation2 + $0x148] sm:$0xff] %v1080
        %1145 = vst [vmem:[#allocation2 + $0x150] sm:$0xff] %v1081
        %1146 = vst [vmem:[#allocation2 + $0x158] sm:$0xff] %v1082
        %1147 = vst [vmem:[#allocation2 + $0x160] sm:$0xff] %v1083
        %1148 = vst [vmem:[#allocation2 + $0x168] sm:$0xff] %v1084
        %1149 = vst [vmem:[#allocation2 + $0x170] sm:$0xff] %v1085
        %1150 = vst [vmem:[#allocation2 + $0x178] sm:$0xff] %v1086
        %1151 = vst [vmem:[#allocation2 + $0x180] sm:$0xff] %v1087
        %1152 = vst [vmem:[#allocation2 + $0x188] sm:$0xff] %v1088
        %1153 = vst [vmem:[#allocation2 + $0x190] sm:$0xff] %v1089
        %1154 = vst [vmem:[#allocation2 + $0x198] sm:$0xff] %v1090
        %1155 = vst [vmem:[#allocation2 + $0x1a0] sm:$0xff] %v1091
        %1156 = vst [vmem:[#allocation2 + $0x1a8] sm:$0xff] %v1092
        %1157 = vst [vmem:[#allocation2 + $0x1b0] sm:$0xff] %v1093
        %1158 = vst [vmem:[#allocation2 + $0x1b8] sm:$0xff] %v1094
        %1159 = vst [vmem:[#allocation2 + $0x1c0] sm:$0xff] %v1095
        %1160 = vst [vmem:[#allocation2 + $0x1c8] sm:$0xff] %v1096
        %1161 = vst [vmem:[#allocation2 + $0x1d0] sm:$0xff] %v1097
        %1162 = vst [vmem:[#allocation2 + $0x1d8] sm:$0xff] %v1098
        %1163 = vst [vmem:[#allocation2 + $0x1e0] sm:$0xff] %v1099
        %1164 = vst [vmem:[#allocation2 + $0x1e8] sm:$0xff] %v1100
        %1165 = vst [vmem:[#allocation2 + $0x1f0] sm:$0xff] %v1101
        %1166 = vst [vmem:[#allocation2 + $0x1f8] sm:$0xff] %v1102
        // Predicated region
        $region49: #{tpu_custom_call.1} parent=35 // pred_check
          %p1167 = pneg %p298
        $region50: #{tpu_custom_call.1} parent=35 // pred_check_branch
          %1169 = sbr.rel (%p1167) target = $region52
        $region51: #{tpu_custom_call.1} parent=35 // pred_region
          %v1170 = vld [vmem:[#allocation2] sm:$0xff]
          %v1171 = vld [vmem:[#allocation2 + $0x8] sm:$0xff]
          %v1172 = vld [vmem:[#allocation2 + $0x10] sm:$0xff]
          %v1173 = vld [vmem:[#allocation2 + $0x18] sm:$0xff]
          %v1174 = vld [vmem:[#allocation2 + $0x20] sm:$0xff]
          %v1175 = vld [vmem:[#allocation2 + $0x28] sm:$0xff]
          %v1176 = vld [vmem:[#allocation2 + $0x30] sm:$0xff]
          %v1177 = vld [vmem:[#allocation2 + $0x38] sm:$0xff]
          %v1178 = vld [vmem:[#allocation2 + $0x40] sm:$0xff]
          %v1179 = vld [vmem:[#allocation2 + $0x48] sm:$0xff]
          %v1180 = vld [vmem:[#allocation2 + $0x50] sm:$0xff]
          %v1181 = vld [vmem:[#allocation2 + $0x58] sm:$0xff]
          %v1182 = vld [vmem:[#allocation2 + $0x60] sm:$0xff]
          %v1183 = vld [vmem:[#allocation2 + $0x68] sm:$0xff]
          %v1184 = vld [vmem:[#allocation2 + $0x70] sm:$0xff]
          %v1185 = vld [vmem:[#allocation2 + $0x78] sm:$0xff]
          %v1186 = vld [vmem:[#allocation2 + $0x80] sm:$0xff]
          %v1187 = vld [vmem:[#allocation2 + $0x88] sm:$0xff]
          %v1188 = vld [vmem:[#allocation2 + $0x90] sm:$0xff]
          %v1189 = vld [vmem:[#allocation2 + $0x98] sm:$0xff]
          %v1190 = vld [vmem:[#allocation2 + $0xa0] sm:$0xff]
          %v1191 = vld [vmem:[#allocation2 + $0xa8] sm:$0xff]
          %v1192 = vld [vmem:[#allocation2 + $0xb0] sm:$0xff]
          %v1193 = vld [vmem:[#allocation2 + $0xb8] sm:$0xff]
          %v1194 = vld [vmem:[#allocation2 + $0xc0] sm:$0xff]
          %v1195 = vld [vmem:[#allocation2 + $0xc8] sm:$0xff]
          %v1196 = vld [vmem:[#allocation2 + $0xd0] sm:$0xff]
          %v1197 = vld [vmem:[#allocation2 + $0xd8] sm:$0xff]
          %v1198 = vld [vmem:[#allocation2 + $0xe0] sm:$0xff]
          %v1199 = vld [vmem:[#allocation2 + $0xe8] sm:$0xff]
          %v1200 = vld [vmem:[#allocation2 + $0xf0] sm:$0xff]
          %v1201 = vld [vmem:[#allocation2 + $0xf8] sm:$0xff]
          %v1202 = vld [vmem:[#allocation2 + $0x100] sm:$0xff]
          %v1203 = vld [vmem:[#allocation2 + $0x108] sm:$0xff]
          %v1204 = vld [vmem:[#allocation2 + $0x110] sm:$0xff]
          %v1205 = vld [vmem:[#allocation2 + $0x118] sm:$0xff]
          %v1206 = vld [vmem:[#allocation2 + $0x120] sm:$0xff]
          %v1207 = vld [vmem:[#allocation2 + $0x128] sm:$0xff]
          %v1208 = vld [vmem:[#allocation2 + $0x130] sm:$0xff]
          %v1209 = vld [vmem:[#allocation2 + $0x138] sm:$0xff]
          %v1210 = vld [vmem:[#allocation2 + $0x140] sm:$0xff]
          %v1211 = vld [vmem:[#allocation2 + $0x148] sm:$0xff]
          %v1212 = vld [vmem:[#allocation2 + $0x150] sm:$0xff]
          %v1213 = vld [vmem:[#allocation2 + $0x158] sm:$0xff]
          %v1214 = vld [vmem:[#allocation2 + $0x160] sm:$0xff]
          %v1215 = vld [vmem:[#allocation2 + $0x168] sm:$0xff]
          %v1216 = vld [vmem:[#allocation2 + $0x170] sm:$0xff]
          %v1217 = vld [vmem:[#allocation2 + $0x178] sm:$0xff]
          %v1218 = vld [vmem:[#allocation2 + $0x180] sm:$0xff]
          %v1219 = vld [vmem:[#allocation2 + $0x188] sm:$0xff]
          %v1220 = vld [vmem:[#allocation2 + $0x190] sm:$0xff]
          %v1221 = vld [vmem:[#allocation2 + $0x198] sm:$0xff]
          %v1222 = vld [vmem:[#allocation2 + $0x1a0] sm:$0xff]
          %v1223 = vld [vmem:[#allocation2 + $0x1a8] sm:$0xff]
          %v1224 = vld [vmem:[#allocation2 + $0x1b0] sm:$0xff]
          %v1225 = vld [vmem:[#allocation2 + $0x1b8] sm:$0xff]
          %v1226 = vld [vmem:[#allocation2 + $0x1c0] sm:$0xff]
          %v1227 = vld [vmem:[#allocation2 + $0x1c8] sm:$0xff]
          %v1228 = vld [vmem:[#allocation2 + $0x1d0] sm:$0xff]
          %v1229 = vld [vmem:[#allocation2 + $0x1d8] sm:$0xff]
          %v1230 = vld [vmem:[#allocation2 + $0x1e0] sm:$0xff]
          %v1231 = vld [vmem:[#allocation2 + $0x1e8] sm:$0xff]
          %v1232 = vld [vmem:[#allocation2 + $0x1f0] sm:$0xff]
          %v1233 = vld [vmem:[#allocation2 + $0x1f8] sm:$0xff]
          %v1234 = vld [vmem:[%s292] sm:$0x1]
          %v1236 = vlaneseq
          %v1237 = vshrl.u32 %v1236, 7
          %v1238 = vsub.s32 0, %v1237
          %v1239 = vrot.slane %v1234, %v1238
          %v1241 = vmul.f32 %v1170, %v1239
          %v1242 = vmul.f32 %v1171, %v1239
          %v1243 = vmul.f32 %v1172, %v1239
          %v1244 = vmul.f32 %v1173, %v1239
          %v1245 = vmul.f32 %v1174, %v1239
          %v1246 = vmul.f32 %v1175, %v1239
          %v1247 = vmul.f32 %v1176, %v1239
          %v1248 = vmul.f32 %v1177, %v1239
          %v1249 = vmul.f32 %v1178, %v1239
          %v1250 = vmul.f32 %v1179, %v1239
          %v1251 = vmul.f32 %v1180, %v1239
          %v1252 = vmul.f32 %v1181, %v1239
          %v1253 = vmul.f32 %v1182, %v1239
          %v1254 = vmul.f32 %v1183, %v1239
          %v1255 = vmul.f32 %v1184, %v1239
          %v1256 = vmul.f32 %v1185, %v1239
          %v1257 = vmul.f32 %v1186, %v1239
          %v1258 = vmul.f32 %v1187, %v1239
          %v1259 = vmul.f32 %v1188, %v1239
          %v1260 = vmul.f32 %v1189, %v1239
          %v1261 = vmul.f32 %v1190, %v1239
          %v1262 = vmul.f32 %v1191, %v1239
          %v1263 = vmul.f32 %v1192, %v1239
          %v1264 = vmul.f32 %v1193, %v1239
          %v1265 = vmul.f32 %v1194, %v1239
          %v1266 = vmul.f32 %v1195, %v1239
          %v1267 = vmul.f32 %v1196, %v1239
          %v1268 = vmul.f32 %v1197, %v1239
          %v1269 = vmul.f32 %v1198, %v1239
          %v1270 = vmul.f32 %v1199, %v1239
          %v1271 = vmul.f32 %v1200, %v1239
          %v1272 = vmul.f32 %v1201, %v1239
          %v1273 = vmul.f32 %v1202, %v1239
          %v1274 = vmul.f32 %v1203, %v1239
          %v1275 = vmul.f32 %v1204, %v1239
          %v1276 = vmul.f32 %v1205, %v1239
          %v1277 = vmul.f32 %v1206, %v1239
          %v1278 = vmul.f32 %v1207, %v1239
          %v1279 = vmul.f32 %v1208, %v1239
          %v1280 = vmul.f32 %v1209, %v1239
          %v1281 = vmul.f32 %v1210, %v1239
          %v1282 = vmul.f32 %v1211, %v1239
          %v1283 = vmul.f32 %v1212, %v1239
          %v1284 = vmul.f32 %v1213, %v1239
          %v1285 = vmul.f32 %v1214, %v1239
          %v1286 = vmul.f32 %v1215, %v1239
          %v1287 = vmul.f32 %v1216, %v1239
          %v1288 = vmul.f32 %v1217, %v1239
          %v1289 = vmul.f32 %v1218, %v1239
          %v1290 = vmul.f32 %v1219, %v1239
          %v1291 = vmul.f32 %v1220, %v1239
          %v1292 = vmul.f32 %v1221, %v1239
          %v1293 = vmul.f32 %v1222, %v1239
          %v1294 = vmul.f32 %v1223, %v1239
          %v1295 = vmul.f32 %v1224, %v1239
          %v1296 = vmul.f32 %v1225, %v1239
          %v1297 = vmul.f32 %v1226, %v1239
          %v1298 = vmul.f32 %v1227, %v1239
          %v1299 = vmul.f32 %v1228, %v1239
          %v1300 = vmul.f32 %v1229, %v1239
          %v1301 = vmul.f32 %v1230, %v1239
          %v1302 = vmul.f32 %v1231, %v1239
          %v1303 = vmul.f32 %v1232, %v1239
          %v1304 = vmul.f32 %v1233, %v1239
          %v1305 = vld [vmem:[%s295] sm:$0x1]
          %v1307 = vlaneseq
          %v1308 = vshrl.u32 %v1307, 7
          %v1309 = vsub.s32 0, %v1308
          %v1310 = vrot.slane %v1305, %v1309
          %v1312 = vadd.f32 %v1241, %v1310
          %v1313 = vadd.f32 %v1242, %v1310
          %v1314 = vadd.f32 %v1243, %v1310
          %v1315 = vadd.f32 %v1244, %v1310
          %v1316 = vadd.f32 %v1245, %v1310
          %v1317 = vadd.f32 %v1246, %v1310
          %v1318 = vadd.f32 %v1247, %v1310
          %v1319 = vadd.f32 %v1248, %v1310
          %v1320 = vadd.f32 %v1249, %v1310
          %v1321 = vadd.f32 %v1250, %v1310
          %v1322 = vadd.f32 %v1251, %v1310
          %v1323 = vadd.f32 %v1252, %v1310
          %v1324 = vadd.f32 %v1253, %v1310
          %v1325 = vadd.f32 %v1254, %v1310
          %v1326 = vadd.f32 %v1255, %v1310
          %v1327 = vadd.f32 %v1256, %v1310
          %v1328 = vadd.f32 %v1257, %v1310
          %v1329 = vadd.f32 %v1258, %v1310
          %v1330 = vadd.f32 %v1259, %v1310
          %v1331 = vadd.f32 %v1260, %v1310
          %v1332 = vadd.f32 %v1261, %v1310
          %v1333 = vadd.f32 %v1262, %v1310
          %v1334 = vadd.f32 %v1263, %v1310
          %v1335 = vadd.f32 %v1264, %v1310
          %v1336 = vadd.f32 %v1265, %v1310
          %v1337 = vadd.f32 %v1266, %v1310
          %v1338 = vadd.f32 %v1267, %v1310
          %v1339 = vadd.f32 %v1268, %v1310
          %v1340 = vadd.f32 %v1269, %v1310
          %v1341 = vadd.f32 %v1270, %v1310
          %v1342 = vadd.f32 %v1271, %v1310
          %v1343 = vadd.f32 %v1272, %v1310
          %v1344 = vadd.f32 %v1273, %v1310
          %v1345 = vadd.f32 %v1274, %v1310
          %v1346 = vadd.f32 %v1275, %v1310
          %v1347 = vadd.f32 %v1276, %v1310
          %v1348 = vadd.f32 %v1277, %v1310
          %v1349 = vadd.f32 %v1278, %v1310
          %v1350 = vadd.f32 %v1279, %v1310
          %v1351 = vadd.f32 %v1280, %v1310
          %v1352 = vadd.f32 %v1281, %v1310
          %v1353 = vadd.f32 %v1282, %v1310
          %v1354 = vadd.f32 %v1283, %v1310
          %v1355 = vadd.f32 %v1284, %v1310
          %v1356 = vadd.f32 %v1285, %v1310
          %v1357 = vadd.f32 %v1286, %v1310
          %v1358 = vadd.f32 %v1287, %v1310
          %v1359 = vadd.f32 %v1288, %v1310
          %v1360 = vadd.f32 %v1289, %v1310
          %v1361 = vadd.f32 %v1290, %v1310
          %v1362 = vadd.f32 %v1291, %v1310
          %v1363 = vadd.f32 %v1292, %v1310
          %v1364 = vadd.f32 %v1293, %v1310
          %v1365 = vadd.f32 %v1294, %v1310
          %v1366 = vadd.f32 %v1295, %v1310
          %v1367 = vadd.f32 %v1296, %v1310
          %v1368 = vadd.f32 %v1297, %v1310
          %v1369 = vadd.f32 %v1298, %v1310
          %v1370 = vadd.f32 %v1299, %v1310
          %v1371 = vadd.f32 %v1300, %v1310
          %v1372 = vadd.f32 %v1301, %v1310
          %v1373 = vadd.f32 %v1302, %v1310
          %v1374 = vadd.f32 %v1303, %v1310
          %v1375 = vadd.f32 %v1304, %v1310
          %vm1376 = vcmp.ge.f32.partialorder %v1312, 0.0
          %vm1377 = vcmp.ge.f32.partialorder %v1313, 0.0
          %vm1378 = vcmp.ge.f32.partialorder %v1314, 0.0
          %vm1379 = vcmp.ge.f32.partialorder %v1315, 0.0
          %vm1380 = vcmp.ge.f32.partialorder %v1316, 0.0
          %vm1381 = vcmp.ge.f32.partialorder %v1317, 0.0
          %vm1382 = vcmp.ge.f32.partialorder %v1318, 0.0
          %vm1383 = vcmp.ge.f32.partialorder %v1319, 0.0
          %vm1384 = vcmp.ge.f32.partialorder %v1320, 0.0
          %vm1385 = vcmp.ge.f32.partialorder %v1321, 0.0
          %vm1386 = vcmp.ge.f32.partialorder %v1322, 0.0
          %vm1387 = vcmp.ge.f32.partialorder %v1323, 0.0
          %vm1388 = vcmp.ge.f32.partialorder %v1324, 0.0
          %vm1389 = vcmp.ge.f32.partialorder %v1325, 0.0
          %vm1390 = vcmp.ge.f32.partialorder %v1326, 0.0
          %vm1391 = vcmp.ge.f32.partialorder %v1327, 0.0
          %vm1392 = vcmp.ge.f32.partialorder %v1328, 0.0
          %vm1393 = vcmp.ge.f32.partialorder %v1329, 0.0
          %vm1394 = vcmp.ge.f32.partialorder %v1330, 0.0
          %vm1395 = vcmp.ge.f32.partialorder %v1331, 0.0
          %vm1396 = vcmp.ge.f32.partialorder %v1332, 0.0
          %vm1397 = vcmp.ge.f32.partialorder %v1333, 0.0
          %vm1398 = vcmp.ge.f32.partialorder %v1334, 0.0
          %vm1399 = vcmp.ge.f32.partialorder %v1335, 0.0
          %vm1400 = vcmp.ge.f32.partialorder %v1336, 0.0
          %vm1401 = vcmp.ge.f32.partialorder %v1337, 0.0
          %vm1402 = vcmp.ge.f32.partialorder %v1338, 0.0
          %vm1403 = vcmp.ge.f32.partialorder %v1339, 0.0
          %vm1404 = vcmp.ge.f32.partialorder %v1340, 0.0
          %vm1405 = vcmp.ge.f32.partialorder %v1341, 0.0
          %vm1406 = vcmp.ge.f32.partialorder %v1342, 0.0
          %vm1407 = vcmp.ge.f32.partialorder %v1343, 0.0
          %vm1408 = vcmp.ge.f32.partialorder %v1344, 0.0
          %vm1409 = vcmp.ge.f32.partialorder %v1345, 0.0
          %vm1410 = vcmp.ge.f32.partialorder %v1346, 0.0
          %vm1411 = vcmp.ge.f32.partialorder %v1347, 0.0
          %vm1412 = vcmp.ge.f32.partialorder %v1348, 0.0
          %vm1413 = vcmp.ge.f32.partialorder %v1349, 0.0
          %vm1414 = vcmp.ge.f32.partialorder %v1350, 0.0
          %vm1415 = vcmp.ge.f32.partialorder %v1351, 0.0
          %vm1416 = vcmp.ge.f32.partialorder %v1352, 0.0
          %vm1417 = vcmp.ge.f32.partialorder %v1353, 0.0
          %vm1418 = vcmp.ge.f32.partialorder %v1354, 0.0
          %vm1419 = vcmp.ge.f32.partialorder %v1355, 0.0
          %vm1420 = vcmp.ge.f32.partialorder %v1356, 0.0
          %vm1421 = vcmp.ge.f32.partialorder %v1357, 0.0
          %vm1422 = vcmp.ge.f32.partialorder %v1358, 0.0
          %vm1423 = vcmp.ge.f32.partialorder %v1359, 0.0
          %vm1424 = vcmp.ge.f32.partialorder %v1360, 0.0
          %vm1425 = vcmp.ge.f32.partialorder %v1361, 0.0
          %vm1426 = vcmp.ge.f32.partialorder %v1362, 0.0
          %vm1427 = vcmp.ge.f32.partialorder %v1363, 0.0
          %vm1428 = vcmp.ge.f32.partialorder %v1364, 0.0
          %vm1429 = vcmp.ge.f32.partialorder %v1365, 0.0
          %vm1430 = vcmp.ge.f32.partialorder %v1366, 0.0
          %vm1431 = vcmp.ge.f32.partialorder %v1367, 0.0
          %vm1432 = vcmp.ge.f32.partialorder %v1368, 0.0
          %vm1433 = vcmp.ge.f32.partialorder %v1369, 0.0
          %vm1434 = vcmp.ge.f32.partialorder %v1370, 0.0
          %vm1435 = vcmp.ge.f32.partialorder %v1371, 0.0
          %vm1436 = vcmp.ge.f32.partialorder %v1372, 0.0
          %vm1437 = vcmp.ge.f32.partialorder %v1373, 0.0
          %vm1438 = vcmp.ge.f32.partialorder %v1374, 0.0
          %vm1439 = vcmp.ge.f32.partialorder %v1375, 0.0
          %v1440 = vmul.f32 %v1312, 0.1
          %v1441 = vmul.f32 %v1313, 0.1
          %v1442 = vmul.f32 %v1314, 0.1
          %v1443 = vmul.f32 %v1315, 0.1
          %v1444 = vmul.f32 %v1316, 0.1
          %v1445 = vmul.f32 %v1317, 0.1
          %v1446 = vmul.f32 %v1318, 0.1
          %v1447 = vmul.f32 %v1319, 0.1
          %v1448 = vmul.f32 %v1320, 0.1
          %v1449 = vmul.f32 %v1321, 0.1
          %v1450 = vmul.f32 %v1322, 0.1
          %v1451 = vmul.f32 %v1323, 0.1
          %v1452 = vmul.f32 %v1324, 0.1
          %v1453 = vmul.f32 %v1325, 0.1
          %v1454 = vmul.f32 %v1326, 0.1
          %v1455 = vmul.f32 %v1327, 0.1
          %v1456 = vmul.f32 %v1328, 0.1
          %v1457 = vmul.f32 %v1329, 0.1
          %v1458 = vmul.f32 %v1330, 0.1
          %v1459 = vmul.f32 %v1331, 0.1
          %v1460 = vmul.f32 %v1332, 0.1
          %v1461 = vmul.f32 %v1333, 0.1
          %v1462 = vmul.f32 %v1334, 0.1
          %v1463 = vmul.f32 %v1335, 0.1
          %v1464 = vmul.f32 %v1336, 0.1
          %v1465 = vmul.f32 %v1337, 0.1
          %v1466 = vmul.f32 %v1338, 0.1
          %v1467 = vmul.f32 %v1339, 0.1
          %v1468 = vmul.f32 %v1340, 0.1
          %v1469 = vmul.f32 %v1341, 0.1
          %v1470 = vmul.f32 %v1342, 0.1
          %v1471 = vmul.f32 %v1343, 0.1
          %v1472 = vmul.f32 %v1344, 0.1
          %v1473 = vmul.f32 %v1345, 0.1
          %v1474 = vmul.f32 %v1346, 0.1
          %v1475 = vmul.f32 %v1347, 0.1
          %v1476 = vmul.f32 %v1348, 0.1
          %v1477 = vmul.f32 %v1349, 0.1
          %v1478 = vmul.f32 %v1350, 0.1
          %v1479 = vmul.f32 %v1351, 0.1
          %v1480 = vmul.f32 %v1352, 0.1
          %v1481 = vmul.f32 %v1353, 0.1
          %v1482 = vmul.f32 %v1354, 0.1
          %v1483 = vmul.f32 %v1355, 0.1
          %v1484 = vmul.f32 %v1356, 0.1
          %v1485 = vmul.f32 %v1357, 0.1
          %v1486 = vmul.f32 %v1358, 0.1
          %v1487 = vmul.f32 %v1359, 0.1
          %v1488 = vmul.f32 %v1360, 0.1
          %v1489 = vmul.f32 %v1361, 0.1
          %v1490 = vmul.f32 %v1362, 0.1
          %v1491 = vmul.f32 %v1363, 0.1
          %v1492 = vmul.f32 %v1364, 0.1
          %v1493 = vmul.f32 %v1365, 0.1
          %v1494 = vmul.f32 %v1366, 0.1
          %v1495 = vmul.f32 %v1367, 0.1
          %v1496 = vmul.f32 %v1368, 0.1
          %v1497 = vmul.f32 %v1369, 0.1
          %v1498 = vmul.f32 %v1370, 0.1
          %v1499 = vmul.f32 %v1371, 0.1
          %v1500 = vmul.f32 %v1372, 0.1
          %v1501 = vmul.f32 %v1373, 0.1
          %v1502 = vmul.f32 %v1374, 0.1
          %v1503 = vmul.f32 %v1375, 0.1
          %v1504 = vsel %vm1376, %v1312, %v1440
          %v1505 = vsel %vm1377, %v1313, %v1441
          %v1506 = vsel %vm1378, %v1314, %v1442
          %v1507 = vsel %vm1379, %v1315, %v1443
          %v1508 = vsel %vm1380, %v1316, %v1444
          %v1509 = vsel %vm1381, %v1317, %v1445
          %v1510 = vsel %vm1382, %v1318, %v1446
          %v1511 = vsel %vm1383, %v1319, %v1447
          %v1512 = vsel %vm1384, %v1320, %v1448
          %v1513 = vsel %vm1385, %v1321, %v1449
          %v1514 = vsel %vm1386, %v1322, %v1450
          %v1515 = vsel %vm1387, %v1323, %v1451
          %v1516 = vsel %vm1388, %v1324, %v1452
          %v1517 = vsel %vm1389, %v1325, %v1453
          %v1518 = vsel %vm1390, %v1326, %v1454
          %v1519 = vsel %vm1391, %v1327, %v1455
          %v1520 = vsel %vm1392, %v1328, %v1456
          %v1521 = vsel %vm1393, %v1329, %v1457
          %v1522 = vsel %vm1394, %v1330, %v1458
          %v1523 = vsel %vm1395, %v1331, %v1459
          %v1524 = vsel %vm1396, %v1332, %v1460
          %v1525 = vsel %vm1397, %v1333, %v1461
          %v1526 = vsel %vm1398, %v1334, %v1462
          %v1527 = vsel %vm1399, %v1335, %v1463
          %v1528 = vsel %vm1400, %v1336, %v1464
          %v1529 = vsel %vm1401, %v1337, %v1465
          %v1530 = vsel %vm1402, %v1338, %v1466
          %v1531 = vsel %vm1403, %v1339, %v1467
          %v1532 = vsel %vm1404, %v1340, %v1468
          %v1533 = vsel %vm1405, %v1341, %v1469
          %v1534 = vsel %vm1406, %v1342, %v1470
          %v1535 = vsel %vm1407, %v1343, %v1471
          %v1536 = vsel %vm1408, %v1344, %v1472
          %v1537 = vsel %vm1409, %v1345, %v1473
          %v1538 = vsel %vm1410, %v1346, %v1474
          %v1539 = vsel %vm1411, %v1347, %v1475
          %v1540 = vsel %vm1412, %v1348, %v1476
          %v1541 = vsel %vm1413, %v1349, %v1477
          %v1542 = vsel %vm1414, %v1350, %v1478
          %v1543 = vsel %vm1415, %v1351, %v1479
          %v1544 = vsel %vm1416, %v1352, %v1480
          %v1545 = vsel %vm1417, %v1353, %v1481
          %v1546 = vsel %vm1418, %v1354, %v1482
          %v1547 = vsel %vm1419, %v1355, %v1483
          %v1548 = vsel %vm1420, %v1356, %v1484
          %v1549 = vsel %vm1421, %v1357, %v1485
          %v1550 = vsel %vm1422, %v1358, %v1486
          %v1551 = vsel %vm1423, %v1359, %v1487
          %v1552 = vsel %vm1424, %v1360, %v1488
          %v1553 = vsel %vm1425, %v1361, %v1489
          %v1554 = vsel %vm1426, %v1362, %v1490
          %v1555 = vsel %vm1427, %v1363, %v1491
          %v1556 = vsel %vm1428, %v1364, %v1492
          %v1557 = vsel %vm1429, %v1365, %v1493
          %v1558 = vsel %vm1430, %v1366, %v1494
          %v1559 = vsel %vm1431, %v1367, %v1495
          %v1560 = vsel %vm1432, %v1368, %v1496
          %v1561 = vsel %vm1433, %v1369, %v1497
          %v1562 = vsel %vm1434, %v1370, %v1498
          %v1563 = vsel %vm1435, %v1371, %v1499
          %v1564 = vsel %vm1436, %v1372, %v1500
          %v1565 = vsel %vm1437, %v1373, %v1501
          %v1566 = vsel %vm1438, %v1374, %v1502
          %v1567 = vsel %vm1439, %v1375, %v1503
          %v1568 = vpack.c.bf16 %v1505, %v1504
          %v1569 = vpack.c.bf16 %v1507, %v1506
          %v1570 = vpack.c.bf16 %v1509, %v1508
          %v1571 = vpack.c.bf16 %v1511, %v1510
          %v1572 = vpack.c.bf16 %v1513, %v1512
          %v1573 = vpack.c.bf16 %v1515, %v1514
          %v1574 = vpack.c.bf16 %v1517, %v1516
          %v1575 = vpack.c.bf16 %v1519, %v1518
          %v1576 = vpack.c.bf16 %v1521, %v1520
          %v1577 = vpack.c.bf16 %v1523, %v1522
          %v1578 = vpack.c.bf16 %v1525, %v1524
          %v1579 = vpack.c.bf16 %v1527, %v1526
          %v1580 = vpack.c.bf16 %v1529, %v1528
          %v1581 = vpack.c.bf16 %v1531, %v1530
          %v1582 = vpack.c.bf16 %v1533, %v1532
          %v1583 = vpack.c.bf16 %v1535, %v1534
          %v1584 = vpack.c.bf16 %v1537, %v1536
          %v1585 = vpack.c.bf16 %v1539, %v1538
          %v1586 = vpack.c.bf16 %v1541, %v1540
          %v1587 = vpack.c.bf16 %v1543, %v1542
          %v1588 = vpack.c.bf16 %v1545, %v1544
          %v1589 = vpack.c.bf16 %v1547, %v1546
          %v1590 = vpack.c.bf16 %v1549, %v1548
          %v1591 = vpack.c.bf16 %v1551, %v1550
          %v1592 = vpack.c.bf16 %v1553, %v1552
          %v1593 = vpack.c.bf16 %v1555, %v1554
          %v1594 = vpack.c.bf16 %v1557, %v1556
          %v1595 = vpack.c.bf16 %v1559, %v1558
          %v1596 = vpack.c.bf16 %v1561, %v1560
          %v1597 = vpack.c.bf16 %v1563, %v1562
          %v1598 = vpack.c.bf16 %v1565, %v1564
          %v1599 = vpack.c.bf16 %v1567, %v1566
          %v1632 = vunpack.c.l.b16 %v1568
          %v1633 = vunpack.c.h.b16 %v1568
          %v1634 = vunpack.c.l.b16 %v1569
          %v1635 = vunpack.c.h.b16 %v1569
          %v1636 = vunpack.c.l.b16 %v1570
          %v1637 = vunpack.c.h.b16 %v1570
          %v1638 = vunpack.c.l.b16 %v1571
          %v1639 = vunpack.c.h.b16 %v1571
          %v1640 = vunpack.c.l.b16 %v1572
          %v1641 = vunpack.c.h.b16 %v1572
          %v1642 = vunpack.c.l.b16 %v1573
          %v1643 = vunpack.c.h.b16 %v1573
          %v1644 = vunpack.c.l.b16 %v1574
          %v1645 = vunpack.c.h.b16 %v1574
          %v1646 = vunpack.c.l.b16 %v1575
          %v1647 = vunpack.c.h.b16 %v1575
          %v1648 = vunpack.c.l.b16 %v1576
          %v1649 = vunpack.c.h.b16 %v1576
          %v1650 = vunpack.c.l.b16 %v1577
          %v1651 = vunpack.c.h.b16 %v1577
          %v1652 = vunpack.c.l.b16 %v1578
          %v1653 = vunpack.c.h.b16 %v1578
          %v1654 = vunpack.c.l.b16 %v1579
          %v1655 = vunpack.c.h.b16 %v1579
          %v1656 = vunpack.c.l.b16 %v1580
          %v1657 = vunpack.c.h.b16 %v1580
          %v1658 = vunpack.c.l.b16 %v1581
          %v1659 = vunpack.c.h.b16 %v1581
          %v1660 = vunpack.c.l.b16 %v1582
          %v1661 = vunpack.c.h.b16 %v1582
          %v1662 = vunpack.c.l.b16 %v1583
          %v1663 = vunpack.c.h.b16 %v1583
          %v1664 = vunpack.c.l.b16 %v1584
          %v1665 = vunpack.c.h.b16 %v1584
          %v1666 = vunpack.c.l.b16 %v1585
          %v1667 = vunpack.c.h.b16 %v1585
          %v1668 = vunpack.c.l.b16 %v1586
          %v1669 = vunpack.c.h.b16 %v1586
          %v1670 = vunpack.c.l.b16 %v1587
          %v1671 = vunpack.c.h.b16 %v1587
          %v1672 = vunpack.c.l.b16 %v1588
          %v1673 = vunpack.c.h.b16 %v1588
          %v1674 = vunpack.c.l.b16 %v1589
          %v1675 = vunpack.c.h.b16 %v1589
          %v1676 = vunpack.c.l.b16 %v1590
          %v1677 = vunpack.c.h.b16 %v1590
          %v1678 = vunpack.c.l.b16 %v1591
          %v1679 = vunpack.c.h.b16 %v1591
          %v1680 = vunpack.c.l.b16 %v1592
          %v1681 = vunpack.c.h.b16 %v1592
          %v1682 = vunpack.c.l.b16 %v1593
          %v1683 = vunpack.c.h.b16 %v1593
          %v1684 = vunpack.c.l.b16 %v1594
          %v1685 = vunpack.c.h.b16 %v1594
          %v1686 = vunpack.c.l.b16 %v1595
          %v1687 = vunpack.c.h.b16 %v1595
          %v1688 = vunpack.c.l.b16 %v1596
          %v1689 = vunpack.c.h.b16 %v1596
          %v1690 = vunpack.c.l.b16 %v1597
          %v1691 = vunpack.c.h.b16 %v1597
          %v1692 = vunpack.c.l.b16 %v1598
          %v1693 = vunpack.c.h.b16 %v1598
          %v1694 = vunpack.c.l.b16 %v1599
          %v1695 = vunpack.c.h.b16 %v1599
          %v1696 = vpack.c.b16 %v1632, %v1632
          %v1697 = vpack.c.b16 %v1633, %v1633
          %v1698 = vpack.c.b16 %v1634, %v1634
          %v1699 = vpack.c.b16 %v1635, %v1635
          %v1700 = vpack.c.b16 %v1636, %v1636
          %v1701 = vpack.c.b16 %v1637, %v1637
          %v1702 = vpack.c.b16 %v1638, %v1638
          %v1703 = vpack.c.b16 %v1639, %v1639
          %v1704 = vpack.c.b16 %v1640, %v1640
          %v1705 = vpack.c.b16 %v1641, %v1641
          %v1706 = vpack.c.b16 %v1642, %v1642
          %v1707 = vpack.c.b16 %v1643, %v1643
          %v1708 = vpack.c.b16 %v1644, %v1644
          %v1709 = vpack.c.b16 %v1645, %v1645
          %v1710 = vpack.c.b16 %v1646, %v1646
          %v1711 = vpack.c.b16 %v1647, %v1647
          %v1712 = vpack.c.b16 %v1648, %v1648
          %v1713 = vpack.c.b16 %v1649, %v1649
          %v1714 = vpack.c.b16 %v1650, %v1650
          %v1715 = vpack.c.b16 %v1651, %v1651
          %v1716 = vpack.c.b16 %v1652, %v1652
          %v1717 = vpack.c.b16 %v1653, %v1653
          %v1718 = vpack.c.b16 %v1654, %v1654
          %v1719 = vpack.c.b16 %v1655, %v1655
          %v1720 = vpack.c.b16 %v1656, %v1656
          %v1721 = vpack.c.b16 %v1657, %v1657
          %v1722 = vpack.c.b16 %v1658, %v1658
          %v1723 = vpack.c.b16 %v1659, %v1659
          %v1724 = vpack.c.b16 %v1660, %v1660
          %v1725 = vpack.c.b16 %v1661, %v1661
          %v1726 = vpack.c.b16 %v1662, %v1662
          %v1727 = vpack.c.b16 %v1663, %v1663
          %v1728 = vpack.c.b16 %v1664, %v1664
          %v1729 = vpack.c.b16 %v1665, %v1665
          %v1730 = vpack.c.b16 %v1666, %v1666
          %v1731 = vpack.c.b16 %v1667, %v1667
          %v1732 = vpack.c.b16 %v1668, %v1668
          %v1733 = vpack.c.b16 %v1669, %v1669
          %v1734 = vpack.c.b16 %v1670, %v1670
          %v1735 = vpack.c.b16 %v1671, %v1671
          %v1736 = vpack.c.b16 %v1672, %v1672
          %v1737 = vpack.c.b16 %v1673, %v1673
          %v1738 = vpack.c.b16 %v1674, %v1674
          %v1739 = vpack.c.b16 %v1675, %v1675
          %v1740 = vpack.c.b16 %v1676, %v1676
          %v1741 = vpack.c.b16 %v1677, %v1677
          %v1742 = vpack.c.b16 %v1678, %v1678
          %v1743 = vpack.c.b16 %v1679, %v1679
          %v1744 = vpack.c.b16 %v1680, %v1680
          %v1745 = vpack.c.b16 %v1681, %v1681
          %v1746 = vpack.c.b16 %v1682, %v1682
          %v1747 = vpack.c.b16 %v1683, %v1683
          %v1748 = vpack.c.b16 %v1684, %v1684
          %v1749 = vpack.c.b16 %v1685, %v1685
          %v1750 = vpack.c.b16 %v1686, %v1686
          %v1751 = vpack.c.b16 %v1687, %v1687
          %v1752 = vpack.c.b16 %v1688, %v1688
          %v1753 = vpack.c.b16 %v1689, %v1689
          %v1754 = vpack.c.b16 %v1690, %v1690
          %v1755 = vpack.c.b16 %v1691, %v1691
          %v1756 = vpack.c.b16 %v1692, %v1692
          %v1757 = vpack.c.b16 %v1693, %v1693
          %v1758 = vpack.c.b16 %v1694, %v1694
          %v1759 = vpack.c.b16 %v1695, %v1695
          %1824 = vst [vmem:[%s287] sm:$0xf] %v1696
          %1825 = vst [vmem:[%s287 + $0x4] sm:$0xf] %v1697
          %1826 = vst [vmem:[%s287 + $0x8] sm:$0xf] %v1698
          %1827 = vst [vmem:[%s287 + $0xc] sm:$0xf] %v1699
          %1828 = vst [vmem:[%s287 + $0x10] sm:$0xf] %v1700
          %1829 = vst [vmem:[%s287 + $0x14] sm:$0xf] %v1701
          %1830 = vst [vmem:[%s287 + $0x18] sm:$0xf] %v1702
          %1831 = vst [vmem:[%s287 + $0x1c] sm:$0xf] %v1703
          %1832 = vst [vmem:[%s287 + $0x20] sm:$0xf] %v1704
          %1833 = vst [vmem:[%s287 + $0x24] sm:$0xf] %v1705
          %1834 = vst [vmem:[%s287 + $0x28] sm:$0xf] %v1706
          %1835 = vst [vmem:[%s287 + $0x2c] sm:$0xf] %v1707
          %1836 = vst [vmem:[%s287 + $0x30] sm:$0xf] %v1708
          %1837 = vst [vmem:[%s287 + $0x34] sm:$0xf] %v1709
          %1838 = vst [vmem:[%s287 + $0x38] sm:$0xf] %v1710
          %1839 = vst [vmem:[%s287 + $0x3c] sm:$0xf] %v1711
          %1840 = vst [vmem:[%s287 + $0x40] sm:$0xf] %v1712
          %1841 = vst [vmem:[%s287 + $0x44] sm:$0xf] %v1713
          %1842 = vst [vmem:[%s287 + $0x48] sm:$0xf] %v1714
          %1843 = vst [vmem:[%s287 + $0x4c] sm:$0xf] %v1715
          %1844 = vst [vmem:[%s287 + $0x50] sm:$0xf] %v1716
          %1845 = vst [vmem:[%s287 + $0x54] sm:$0xf] %v1717
          %1846 = vst [vmem:[%s287 + $0x58] sm:$0xf] %v1718
          %1847 = vst [vmem:[%s287 + $0x5c] sm:$0xf] %v1719
          %1848 = vst [vmem:[%s287 + $0x60] sm:$0xf] %v1720
          %1849 = vst [vmem:[%s287 + $0x64] sm:$0xf] %v1721
          %1850 = vst [vmem:[%s287 + $0x68] sm:$0xf] %v1722
          %1851 = vst [vmem:[%s287 + $0x6c] sm:$0xf] %v1723
          %1852 = vst [vmem:[%s287 + $0x70] sm:$0xf] %v1724
          %1853 = vst [vmem:[%s287 + $0x74] sm:$0xf] %v1725
          %1854 = vst [vmem:[%s287 + $0x78] sm:$0xf] %v1726
          %1855 = vst [vmem:[%s287 + $0x7c] sm:$0xf] %v1727
          %1856 = vst [vmem:[%s287 + $0x80] sm:$0xf] %v1728
          %1857 = vst [vmem:[%s287 + $0x84] sm:$0xf] %v1729
          %1858 = vst [vmem:[%s287 + $0x88] sm:$0xf] %v1730
          %1859 = vst [vmem:[%s287 + $0x8c] sm:$0xf] %v1731
          %1860 = vst [vmem:[%s287 + $0x90] sm:$0xf] %v1732
          %1861 = vst [vmem:[%s287 + $0x94] sm:$0xf] %v1733
          %1862 = vst [vmem:[%s287 + $0x98] sm:$0xf] %v1734
          %1863 = vst [vmem:[%s287 + $0x9c] sm:$0xf] %v1735
          %1864 = vst [vmem:[%s287 + $0xa0] sm:$0xf] %v1736
          %1865 = vst [vmem:[%s287 + $0xa4] sm:$0xf] %v1737
          %1866 = vst [vmem:[%s287 + $0xa8] sm:$0xf] %v1738
          %1867 = vst [vmem:[%s287 + $0xac] sm:$0xf] %v1739
          %1868 = vst [vmem:[%s287 + $0xb0] sm:$0xf] %v1740
          %1869 = vst [vmem:[%s287 + $0xb4] sm:$0xf] %v1741
          %1870 = vst [vmem:[%s287 + $0xb8] sm:$0xf] %v1742
          %1871 = vst [vmem:[%s287 + $0xbc] sm:$0xf] %v1743
          %1872 = vst [vmem:[%s287 + $0xc0] sm:$0xf] %v1744
          %1873 = vst [vmem:[%s287 + $0xc4] sm:$0xf] %v1745
          %1874 = vst [vmem:[%s287 + $0xc8] sm:$0xf] %v1746
          %1875 = vst [vmem:[%s287 + $0xcc] sm:$0xf] %v1747
          %1876 = vst [vmem:[%s287 + $0xd0] sm:$0xf] %v1748
          %1877 = vst [vmem:[%s287 + $0xd4] sm:$0xf] %v1749
          %1878 = vst [vmem:[%s287 + $0xd8] sm:$0xf] %v1750
          %1879 = vst [vmem:[%s287 + $0xdc] sm:$0xf] %v1751
          %1880 = vst [vmem:[%s287 + $0xe0] sm:$0xf] %v1752
          %1881 = vst [vmem:[%s287 + $0xe4] sm:$0xf] %v1753
          %1882 = vst [vmem:[%s287 + $0xe8] sm:$0xf] %v1754
          %1883 = vst [vmem:[%s287 + $0xec] sm:$0xf] %v1755
          %1884 = vst [vmem:[%s287 + $0xf0] sm:$0xf] %v1756
          %1885 = vst [vmem:[%s287 + $0xf4] sm:$0xf] %v1757
          %1886 = vst [vmem:[%s287 + $0xf8] sm:$0xf] %v1758
          %1887 = vst [vmem:[%s287 + $0xfc] sm:$0xf] %v1759
        $region52: #{tpu_custom_call.1} parent=35 // pred_fallthru
          _
        %s1888 = sand.u32 %s159, 1
        %s1889 = scalar_lea.sflag [#allocation5], %s1888
        %s1890 = sand.u32 %s159, 1
        %s1891 = smul.addr %s1890, 256
        %s1892 = scalar_lea.vmem [#allocation8], %s1891
        // Predicated region
        $region53: #{tpu_custom_call.1} parent=35 // pred_check
          %p1893 = pneg %p169
        $region54: #{tpu_custom_call.1} parent=35 // pred_check_branch
          %1895 = sbr.rel (%p1893) target = $region56
        $region55: #{tpu_custom_call.1} parent=35 // pred_region
          %s1896 = smul.u32 64, %s27
          %s1898 = ssub.s32 4096, 4096
          %1899 = vsyncadd %s1889, %s1898
          %s1900 = sadd.s32 %s28, %s1896
          %s1901 = smul.addr %s1900, 64
          %s1902 = scalar_lea.hbm %s4, %s1901
          %s1903 = sshll.u32 %s1892, 4
          %s1904 = int_to_ptr.vmem [resolvable:$true] %s1903
          %1909 = dma.vmem_to_hbm [thread:$0]  %s1904, 4096, %s1902, %s1889, 64, 64, 4
        $region56: #{tpu_custom_call.1} parent=35 // pred_fallthru
          _
      $region36: #{tpu_custom_call.1} parent=5 // pred_fallthru
        _
      %p1910 = scmp.le.s32.totalorder 2, %s17
      // Predicated region
      $region57: #{tpu_custom_call.1} parent=5 // pred_check
        %p1911 = pneg %p1910
      $region58: #{tpu_custom_call.1} parent=5 // pred_check_branch
        %1913 = sbr.rel (%p1911) target = $region60
      $region59: #{tpu_custom_call.1} parent=5 // pred_region
        %s1914 = ssub.s32 %s17, 2
        // Predicated region
        $region61: #{tpu_custom_call.1} parent=59 // pred_check
          %p1915 = pneg %p175
        $region62: #{tpu_custom_call.1} parent=59 // pred_check_branch
          %1917 = sbr.rel (%p1915) target = $region64
        $region63: #{tpu_custom_call.1} parent=59 // pred_region
          %s1918 = sand.u32 %s160, 1
          %s1919 = scalar_lea.sflag [#allocation5], %s1918
          %s1920 = sand.u32 %s160, 1
          %s1921 = smul.addr %s1920, 256
          %s1922 = scalar_lea.vmem [#allocation8], %s1921
          %1923 = dma.done %s1919, 4096
        $region64: #{tpu_custom_call.1} parent=59 // pred_fallthru
          _
      $region60: #{tpu_custom_call.1} parent=5 // pred_fallthru
        _
    $region6: #{tpu_custom_call.1} parent=1 // loop_footer
      %s21 = sadd.s32 1, %s17
    $region7: #{tpu_custom_call.1} parent=1 // loop_footer_branch
      %16 = sbr.rel target = $region3
    $region8: #{tpu_custom_call.1} parent=1 // loop_exit
      _
    %1924 = vsyncpa [#allocation4], 1
    %s1925 = scalar_lea.sflag [#allocation4], 1
    %1926 = vsyncpa %s1925, 1
    %1927 = vsyncpa [#allocation7], 1
    %1928 = vsyncpa [#allocation5], 1
    %s1929 = scalar_lea.sflag [#allocation5], 1
    %1930 = vsyncpa %s1929, 1

</llo_original>
